<compile_context>
chip_gen: v7x
topology: tpu7x:2x2x1
jax: 0.10.0
libtpu: 0.0.40
codegen_flags: <defaults>
</compile_context>

<pallas_src>
import jax
import jax.numpy as jnp
from jax.experimental import pallas as pl
from jax.experimental.pallas import tpu as pltpu

LANE = 128
VMEM_LIMIT = 32 * 1024 * 1024


def _round_up(x, m):
    return (x + m - 1) // m * m


# ---------------------------------------------------------------------------
# Kernel 1: 1x1 conv as MXU matmul + per-block BN partial statistics.
# Optionally fuses a per-channel affine + ReLU on the *input* tile (used to
# apply the previous layer's BN/ReLU without an extra HBM pass).
# ---------------------------------------------------------------------------
def _make_mm_stats_kernel(with_affine, tm, m_actual, mask_rows):
    def kernel(*refs):
        if with_affine:
            x_ref, s_ref, b_ref, w_ref, y_ref, sum_ref, sq_ref = refs
        else:
            x_ref, w_ref, y_ref, sum_ref, sq_ref = refs

        x = x_ref[...]
        if with_affine:
            xf = jnp.maximum(x.astype(jnp.float32) * s_ref[...] + b_ref[...], 0.0)
            if mask_rows:  # keep stats exact when M was padded
                rows = (jax.lax.broadcasted_iota(jnp.int32, (tm, 1), 0)
                        + pl.program_id(0) * tm)
                xf = jnp.where(rows < m_actual, xf, 0.0)
            x = xf.astype(jnp.bfloat16)

        y = jnp.dot(x, w_ref[...], preferred_element_type=jnp.float32)
        y_ref[...] = y.astype(y_ref.dtype)          # bf16 store (halved HBM traffic)

        tn = y.shape[1]
        sum_ref[...] = jnp.sum(y, axis=0, keepdims=True).reshape(1, 1, tn)
        sq_ref[...] = jnp.sum(y * y, axis=0, keepdims=True).reshape(1, 1, tn)

    return kernel


def conv1x1_bn_stats(x, w, scale=None, bias=None, tm=1024, tn=512):
    """y = (relu(x*scale+bias) if scale is not None else x) @ w   (bf16 out),
    plus per-channel sum / sum-of-squares of y (f32, for BN folding).
    x: (M, K) bf16 (or f32 when the input affine is fused), w: (K, N) bf16."""
    M, K = x.shape
    _, Nout = w.shape
    tm = min(tm, _round_up(M, 8))
    Mpad = _round_up(M, tm)
    if Mpad != M:
        x = jnp.pad(x, ((0, Mpad - M), (0, 0)))
    tn = min(tn, Nout)
    if Nout % tn:
        tn = Nout
    Gm, Gn = Mpad // tm, Nout // tn

    with_affine = scale is not None
    mask_rows = with_affine and (Mpad != M)

    in_specs = [pl.BlockSpec((tm, K), lambda i, j: (i, 0))]
    args = [x]
    if with_affine:
        in_specs += [pl.BlockSpec((1, K), lambda i, j: (0, 0)),
                     pl.BlockSpec((1, K), lambda i, j: (0, 0))]
        args += [scale.reshape(1, K).astype(jnp.float32),
                 bias.reshape(1, K).astype(jnp.float32)]
    in_specs.append(pl.BlockSpec((K, tn), lambda i, j: (0, j)))
    args.append(w)

    y, su, sq = pl.pallas_call(
        _make_mm_stats_kernel(with_affine, tm, M, mask_rows),
        out_shape=(jax.ShapeDtypeStruct((Mpad, Nout), jnp.bfloat16),
                   jax.ShapeDtypeStruct((Gm, 1, Nout), jnp.float32),
                   jax.ShapeDtypeStruct((Gm, 1, Nout), jnp.float32)),
        grid_spec=pltpu.PrefetchScalarGridSpec(
            num_scalar_prefetch=0,
            grid=(Gm, Gn),
            in_specs=in_specs,
            out_specs=[pl.BlockSpec((tm, tn), lambda i, j: (i, j)),
                       pl.BlockSpec((1, 1, tn), lambda i, j: (i, 0, j)),
                       pl.BlockSpec((1, 1, tn), lambda i, j: (i, 0, j))],
        ),
        compiler_params=pltpu.CompilerParams(
            dimension_semantics=("parallel", "parallel"),
            vmem_limit_bytes=VMEM_LIMIT),
    )(*args)
    return y[:M], jnp.sum(su, axis=(0, 1)), jnp.sum(sq, axis=(0, 1))


# ---------------------------------------------------------------------------
# Kernel 2: 3x3 conv (padding=1, arbitrary stride) on the stride-phase layout,
# with bn1-affine + ReLU fused on its input and per-block BN partial stats.
# The 9 taps are static slices of the resident block, one MXU dot per tap,
# accumulated into a vreg-resident f32 value.
# ---------------------------------------------------------------------------
def _make_conv3x3_kernel(s, H, W, Ho, Wo, Hph, C, Cout):
    off = 2 // s

    def kernel(y_ref, sc_ref, bi_ref, w_ref, o_ref, sum_ref, sq_ref):
        # bn1 affine + ReLU fused on the resident conv1-output block.
        y = y_ref[0].astype(jnp.float32)                         # (HH, Wph, C)
        a = jnp.maximum(y * sc_ref[...] + bi_ref[...], 0.0).astype(jnp.bfloat16)

        # Hoist the (sublane-unaligned) W-offset slices out of the tap loop:
        # only off+1 distinct column offsets exist.
        shifted = [a[:, b:b + Wo, :] for b in range(off + 1)]

        acc = jnp.zeros((Ho * Wo, Cout), jnp.float32)            # vreg-resident
        for kh in range(3):
            for kw in range(3):
                pidx = (kh % s) * s + (kw % s)                   # phase slab
                r0 = pidx * Hph + kh // s
                patch = shifted[kw // s][r0:r0 + Ho]             # (Ho, Wo, C)

                # Re-zero the conv zero-padding halo (conditions are static).
                top = (kh == 0)
                bot = (s * (Ho - 1) + kh > H)
                lef = (kw == 0)
                rig = (s * (Wo - 1) + kw > W)
                if top or bot or lef or rig:
                    ri = jax.lax.broadcasted_iota(jnp.int32, (Ho, Wo, C), 0)
                    ci = jax.lax.broadcasted_iota(jnp.int32, (Ho, Wo, C), 1)
                    ok = None
                    if top:
                        ok = ri >= 1
                    if bot:
                        c2 = ri < Ho - 1
                        ok = c2 if ok is None else (ok & c2)
                    if lef:
                        c2 = ci >= 1
                        ok = c2 if ok is None else (ok & c2)
                    if rig:
                        c2 = ci < Wo - 1
                        ok = c2 if ok is None else (ok & c2)
                    patch = jnp.where(ok, patch, jnp.zeros_like(patch))

                acc = acc + jnp.dot(patch.reshape(Ho * Wo, C),
                                    w_ref[kh * 3 + kw],
                                    preferred_element_type=jnp.float32)
                # TODO(synk): on v6e/v7x, concatenate the taps along K in VMEM
                # and issue one K=9*C MXU dot instead of nine K=C dots.

        o_ref[...] = acc.reshape(1, Ho, Wo, Cout).astype(o_ref.dtype)
        sum_ref[...] = jnp.sum(acc, axis=0, keepdims=True).reshape(1, 1, Cout)
        sq_ref[...] = jnp.sum(acc * acc, axis=0, keepdims=True).reshape(1, 1, Cout)

    return kernel


def conv3x3_bn_stats(y1_phase, scale, bias, w9, stride, H, W):
    """3x3 conv, padding=1, given stride, on the stride-phase layout.
    y1_phase: (N, s*s*Hph, Wph, C) bf16 conv1 output (halo rows are exact
    zeros); scale/bias: bn1 affine applied (+ReLU) in-kernel; w9: (9, C, Cout)
    bf16.  Returns y (N,Ho,Wo,Cout) bf16 + per-channel sum / sumsq (f32)."""
    N, HH, Wph, C = y1_phase.shape
    Cout = w9.shape[2]
    s = stride
    Ho = (H - 1) // s + 1
    Wo = (W - 1) // s + 1
    off = 2 // s
    Hph = Ho + off
    assert HH == s * s * Hph and Wph == Wo + off

    y, su, sq = pl.pallas_call(
        _make_conv3x3_kernel(s, H, W, Ho, Wo, Hph, C, Cout),
        out_shape=(jax.ShapeDtypeStruct((N, Ho, Wo, Cout), jnp.bfloat16),
                   jax.ShapeDtypeStruct((N, 1, Cout), jnp.float32),
                   jax.ShapeDtypeStruct((N, 1, Cout), jnp.float32)),
        grid_spec=pltpu.PrefetchScalarGridSpec(
            num_scalar_prefetch=0,
            grid=(N,),
            in_specs=[pl.BlockSpec((1, HH, Wph, C), lambda n: (n, 0, 0, 0)),
                      pl.BlockSpec((1, 1, C), lambda n: (0, 0, 0)),
                      pl.BlockSpec((1, 1, C), lambda n: (0, 0, 0)),
                      pl.BlockSpec((9, C, Cout), lambda n: (0, 0, 0))],
            out_specs=[pl.BlockSpec((1, Ho, Wo, Cout), lambda n: (n, 0, 0, 0)),
                       pl.BlockSpec((1, 1, Cout), lambda n: (n, 0, 0)),
                       pl.BlockSpec((1, 1, Cout), lambda n: (n, 0, 0))],
        ),
        compiler_params=pltpu.CompilerParams(
            dimension_semantics=("parallel",),
            vmem_limit_bytes=VMEM_LIMIT),
    )(y1_phase,
      scale.reshape(1, 1, C).astype(jnp.float32),
      bias.reshape(1, 1, C).astype(jnp.float32),
      w9)
    return y, jnp.sum(su, axis=(0, 1)), jnp.sum(sq, axis=(0, 1))


# ---------------------------------------------------------------------------
# Kernel 3: fused bn3-affine + shortcut-bn-affine + residual add + ReLU.
# ---------------------------------------------------------------------------
def _residual_kernel(y_ref, s_ref, b_ref, r_ref, rs_ref, rb_ref, o_ref):
    main = y_ref[...].astype(jnp.float32) * s_ref[...] + b_ref[...]
    sc = r_ref[...].astype(jnp.float32) * rs_ref[...] + rb_ref[...]
    o_ref[...] = jnp.maximum(main + sc, 0.0)


def bn_add_relu(y, scale, bias, res, rscale, rbias, tm=2048):
    M, C = y.shape
    tm = min(tm, _round_up(M, 8))
    Mpad = _round_up(M, tm)
    if Mpad != M:
        y = jnp.pad(y, ((0, Mpad - M), (0, 0)))
        res = jnp.pad(res, ((0, Mpad - M), (0, 0)))
    out = pl.pallas_call(
        _residual_kernel,
        out_shape=jax.ShapeDtypeStruct((Mpad, C), jnp.float32),
        grid_spec=pltpu.PrefetchScalarGridSpec(
            num_scalar_prefetch=0,
            grid=(Mpad // tm,),
            in_specs=[pl.BlockSpec((tm, C), lambda i: (i, 0)),
                      pl.BlockSpec((1, C), lambda i: (0, 0)),
                      pl.BlockSpec((1, C), lambda i: (0, 0)),
                      pl.BlockSpec((tm, C), lambda i: (i, 0)),
                      pl.BlockSpec((1, C), lambda i: (0, 0)),
                      pl.BlockSpec((1, C), lambda i: (0, 0))],
            out_specs=pl.BlockSpec((tm, C), lambda i: (i, 0)),
        ),
        compiler_params=pltpu.CompilerParams(
            dimension_semantics=("parallel",),
            vmem_limit_bytes=VMEM_LIMIT),
    )(y, scale.reshape(1, C).astype(jnp.float32),
      bias.reshape(1, C).astype(jnp.float32),
      res, rscale.reshape(1, C).astype(jnp.float32),
      rbias.reshape(1, C).astype(jnp.float32))
    return out[:M]


# ---------------------------------------------------------------------------
# Host-side glue
# ---------------------------------------------------------------------------
def fold_bn(s, sq, count, gamma, beta, eps=1e-5):
    # Tiny per-channel (lane-width) scale/bias fold, kept in plain JAX; the
    # heavy sum/sumsq reductions are fused into the conv kernels.
    mean = s / count
    var = jnp.maximum(sq / count - mean * mean, 0.0)
    scale = gamma / jnp.sqrt(var + eps)
    bias = beta - mean * scale
    return scale.astype(jnp.float32), bias.astype(jnp.float32)


def prepare_params(params, stride, expansion=2):
    """One-time weight packing (lane padding, bf16 cast, tap layout)."""
    planes, in_planes = params["conv1_w"].shape[0], params["conv1_w"].shape[1]
    c_out = expansion * planes
    Ck = _round_up(in_planes, LANE)
    Pk = _round_up(planes, LANE)
    Ok = _round_up(c_out, LANE)

    w1 = jnp.pad(params["conv1_w"][:, :, 0, 0].T,
                 ((0, Ck - in_planes), (0, Pk - planes))).astype(jnp.bfloat16)
    w2 = jnp.transpose(params["conv2_w"], (2, 3, 1, 0)).reshape(9, planes, planes)
    w2 = jnp.pad(w2, ((0, 0), (0, Pk - planes), (0, Pk - planes))).astype(jnp.bfloat16)
    w3 = jnp.pad(params["conv3_w"][:, :, 0, 0].T,
                 ((0, Pk - planes), (0, Ok - c_out))).astype(jnp.bfloat16)

    packed = {
        "stride": stride, "in_planes": in_planes, "planes": planes,
        "c_out": c_out, "Ck": Ck, "Pk": Pk, "Ok": Ok,
        "w1": w1, "w2": w2, "w3": w3,
        "g1": jnp.pad(params["bn1_g"], (0, Pk - planes)),
        "b1": jnp.pad(params["bn1_b"], (0, Pk - planes)),
        "g2": jnp.pad(params["bn2_g"], (0, Pk - planes)),
        "b2": jnp.pad(params["bn2_b"], (0, Pk - planes)),
        "g3": jnp.pad(params["bn3_g"], (0, Ok - c_out)),
        "b3": jnp.pad(params["bn3_b"], (0, Ok - c_out)),
        "has_shortcut": (stride != 1 or in_planes != c_out),
    }
    if packed["has_shortcut"]:
        packed["wsc"] = jnp.pad(params["sc_w"][:, :, 0, 0].T,
                                ((0, Ck - in_planes), (0, Ok - c_out))).astype(jnp.bfloat16)
        packed["gsc"] = jnp.pad(params["sc_g"], (0, Ok - c_out))
        packed["bsc"] = jnp.pad(params["sc_b"], (0, Ok - c_out))
    return packed


def bottleneck_forward(x_nchw, packed):
    s = packed["stride"]
    in_planes, c_out = packed["in_planes"], packed["c_out"]
    Ck, Pk, Ok = packed["Ck"], packed["Pk"], packed["Ok"]
    N, _, H, W = x_nchw.shape
    Ho = (H - 1) // s + 1
    Wo = (W - 1) // s + 1
    off = 2 // s
    Hph, Wph = Ho + off, Wo + off
    HH = s * s * Hph

    # NCHW -> NHWC, lane-pad channels, and build the stride-phase (halo-padded)
    # layout ONCE at the input boundary.  conv1 output inherits this layout,
    # so the conv2 input needs no further host-side marshaling.
    x = jnp.transpose(x_nchw, (0, 2, 3, 1)).astype(jnp.float32)
    x = jnp.pad(x, ((0, 0), (0, 0), (0, 0), (0, Ck - in_planes)))
    xpad = jnp.pad(x, ((0, 0), (1, 1), (1, 1), (0, 0)))
    slabs = []
    for ph in range(s):
        for pw in range(s):
            sl = xpad[:, ph::s, pw::s, :][:, :Hph, :Wph, :]
            sl = jnp.pad(sl, ((0, 0), (0, Hph - sl.shape[1]),
                              (0, Wph - sl.shape[2]), (0, 0)))
            slabs.append(sl)
    x_ph = jnp.concatenate(slabs, axis=1).astype(jnp.bfloat16)   # (N, HH, Wph, Ck)

    M1 = N * HH * Wph          # includes halo rows (exact zeros)
    n_pix = N * H * W          # real pixel count for bn1
    M2 = N * Ho * Wo

    # conv1 (1x1) + bn1 batch statistics (halo rows are zero => stats exact).
    y1, s1, q1 = conv1x1_bn_stats(x_ph.reshape(M1, Ck), packed["w1"])
    sc1, bi1 = fold_bn(s1, q1, n_pix, packed["g1"], packed["b1"])
    y1_ph = y1.reshape(N, HH, Wph, Pk)

    # conv2 (3x3, stride, pad=1) with bn1-affine+ReLU fused on its input,
    # + bn2 batch statistics.
    y2, s2, q2 = conv3x3_bn_stats(y1_ph, sc1, bi1, packed["w2"], s, H, W)
    sc2, bi2 = fold_bn(s2, q2, M2, packed["g2"], packed["b2"])

    # conv3 (1x1) with bn2-affine+ReLU fused on its input, + bn3 statistics.
    y3, s3, q3 = conv1x1_bn_stats(y2.reshape(M2, Pk), packed["w3"],
                                  scale=sc2, bias=bi2)
    sc3, bi3 = fold_bn(s3, q3, M2, packed["g3"], packed["b3"])

    # Shortcut branch.
    if packed["has_shortcut"]:
        p_sc = (1 % s) * s + (1 % s)
        roff = 1 // s
        xsc = x_ph[:, p_sc * Hph + roff: p_sc * Hph + roff + Ho,
                   roff: roff + Wo, :]
        ysc, ss, qs = conv1x1_bn_stats(xsc.reshape(M2, Ck), packed["wsc"])
        scs, bis = fold_bn(ss, qs, M2, packed["gsc"], packed["bsc"])
        res = ysc
    else:
        res = x.astype(jnp.bfloat16).reshape(M2, Ck)   # identity (Ck == Ok)
        scs = jnp.ones((Ok,), jnp.float32)
        bis = jnp.zeros((Ok,), jnp.float32)

    # bn3-affine + shortcut-bn-affine + residual add + ReLU, one fused kernel.
    out = bn_add_relu(y3, sc3, bi3, res, scs, bis)
    out = out.reshape(N, Ho, Wo, Ok)[:, :, :, :c_out]
    return jnp.transpose(out, (0, 3, 1, 2))


# ---------------------------------------------------------------------------
# Pure-JAX reference (training-mode BatchNorm, matches PyTorch Bottleneck)
# ---------------------------------------------------------------------------
def ref_forward(x, params, stride, expansion=2):
    def conv(x, w, s, pad):
        return jax.lax.conv_general_dilated(
            x, w, (s, s), [(pad, pad), (pad, pad)],
            dimension_numbers=("NCHW", "OIHW", "NCHW"))

    def bn(y, g, b, eps=1e-5):
        mean = jnp.mean(y, axis=(0, 2, 3), keepdims=True)
        var = jnp.mean((y - mean) ** 2, axis=(0, 2, 3), keepdims=True)
        return (g.reshape(1, -1, 1, 1) * (y - mean) /
                jnp.sqrt(var + eps) + b.reshape(1, -1, 1, 1))

    planes = params["conv1_w"].shape[0]
    in_planes = params["conv1_w"].shape[1]
    out = jax.nn.relu(bn(conv(x, params["conv1_w"], 1, 0),
                         params["bn1_g"], params["bn1_b"]))
    out = jax.nn.relu(bn(conv(out, params["conv2_w"], stride, 1),
                         params["bn2_g"], params["bn2_b"]))
    out = bn(conv(out, params["conv3_w"], 1, 0),
             params["bn3_g"], params["bn3_b"])
    if stride != 1 or in_planes != expansion * planes:
        sc = bn(conv(x, params["sc_w"], stride, 0),
                params["sc_g"], params["sc_b"])
    else:
        sc = x
    return jax.nn.relu(out + sc)


# ---------------------------------------------------------------------------
if __name__ == "__main__":
    in_planes, planes, stride, expansion = 4, 8, 2, 2
    N, H, W = 2, 16, 16

    key = jax.random.PRNGKey(0)
    k1, k2, k3, k4, kx = jax.random.split(key, 5)

    params = {
        "conv1_w": 0.1 * jax.random.normal(k1, (planes, in_planes, 1, 1), jnp.float32),
        "bn1_g": jnp.ones((planes,), jnp.float32),
        "bn1_b": jnp.zeros((planes,), jnp.float32),
        "conv2_w": 0.1 * jax.random.normal(k2, (planes, planes, 3, 3), jnp.float32),
        "bn2_g": jnp.ones((planes,), jnp.float32),
        "bn2_b": jnp.zeros((planes,), jnp.float32),
        "conv3_w": 0.1 * jax.random.normal(k3, (expansion * planes, planes, 1, 1), jnp.float32),
        "bn3_g": jnp.ones((expansion * planes,), jnp.float32),
        "bn3_b": jnp.zeros((expansion * planes,), jnp.float32),
        "sc_w": 0.1 * jax.random.normal(k4, (expansion * planes, in_planes, 1, 1), jnp.float32),
        "sc_g": jnp.ones((expansion * planes,), jnp.float32),
        "sc_b": jnp.zeros((expansion * planes,), jnp.float32),
    }

    x = jax.random.normal(kx, (N, in_planes, H, W), jnp.float32)

    packed = prepare_params(params, stride, expansion)   # one-time packing
    out = jax.block_until_ready(bottleneck_forward(x, packed))
    ref = jax.block_until_ready(ref_forward(x, params, stride, expansion))

    Ho = (H - 1) // stride + 1
    assert out.shape == ref.shape == (N, expansion * planes, Ho, Ho), (out.shape, ref.shape)
    err = float(jnp.max(jnp.abs(out - ref)))
    assert jnp.allclose(out, ref, atol=5e-2, rtol=5e-2), "max abs diff: %f" % err

    print("KERNEL_OK")
</pallas_src>

<mosaic_0001>
module attributes {stable_mosaic.version = 11 : i64} {
  func.func @kernel(%arg0: i32, %arg1: i32, %arg2: memref<648x128xbf16, #tpu.memory_space<vmem>>, %arg3: memref<128x128xbf16, #tpu.memory_space<vmem>>, %arg4: memref<648x128xbf16, #tpu.memory_space<vmem>>, %arg5: memref<1x1x128xf32, #tpu.memory_space<vmem>>, %arg6: memref<1x1x128xf32, #tpu.memory_space<vmem>>) attributes {dimension_semantics = [#tpu.dimension_semantics<parallel>, #tpu.dimension_semantics<parallel>], iteration_bounds = array<i64: 1, 1>, scalar_prefetch = 0 : i64, scratch_operands = 0 : i64, tpu.core_type = #tpu.core_type<tc>, window_params = [{transform_indices = @transform_0, window_bounds = array<i64: 648, 128>}, {transform_indices = @transform_1, window_bounds = array<i64: 128, 128>}, {transform_indices = @transform_2, window_bounds = array<i64: 648, 128>}, {transform_indices = @transform_3, window_bounds = array<i64: 1, 1, 128>}, {transform_indices = @transform_4, window_bounds = array<i64: 1, 1, 128>}]} {
    %c0 = arith.constant 0 : index
    %c0_0 = arith.constant 0 : index
    %0 = vector.load %arg2[%c0, %c0_0] : memref<648x128xbf16, #tpu.memory_space<vmem>>, vector<648x128xbf16>
    %c0_1 = arith.constant 0 : index
    %c0_2 = arith.constant 0 : index
    %1 = vector.load %arg3[%c0_1, %c0_2] : memref<128x128xbf16, #tpu.memory_space<vmem>>, vector<128x128xbf16>
    %cst = arith.constant dense<0.000000e+00> : vector<648x128xf32>
    %2 = tpu.matmul %0, %1, %cst {dimension_numbers = #tpu.dot_dimension_numbers<[1], [0], [0], [1], [0, 0, 1, 1], [], []>} : vector<648x128xbf16>, vector<128x128xbf16>, vector<648x128xf32> -> vector<648x128xf32>
    %3 = arith.truncf %2 : vector<648x128xf32> to vector<648x128xbf16>
    %c0_3 = arith.constant 0 : index
    %c0_4 = arith.constant 0 : index
    %4 = vector.load %arg4[%c0_3, %c0_4] : memref<648x128xbf16, #tpu.memory_space<vmem>>, vector<648x128xbf16>
    tpu.vector_store %arg4[%c0_3, %c0_4], %3 {strides = array<i32>} : memref<648x128xbf16, #tpu.memory_space<vmem>>, vector<648x128xbf16>,
    %cst_5 = arith.constant dense<0.000000e+00> : vector<128xf32>
    %5 = vector.multi_reduction <add>, %2, %cst_5 [0] : vector<648x128xf32> to vector<128xf32>
    %6 = vector.shape_cast %5 : vector<128xf32> to vector<1x128xf32>
    %7 = vector.shape_cast %6 : vector<1x128xf32> to vector<1x1x128xf32>
    %c0_6 = arith.constant 0 : index
    %c0_7 = arith.constant 0 : index
    %c0_8 = arith.constant 0 : index
    %8 = vector.load %arg5[%c0_6, %c0_7, %c0_8] : memref<1x1x128xf32, #tpu.memory_space<vmem>>, vector<1x1x128xf32>
    tpu.vector_store %arg5[%c0_6, %c0_7, %c0_8], %7 {strides = array<i32>} : memref<1x1x128xf32, #tpu.memory_space<vmem>>, vector<1x1x128xf32>,
    %9 = arith.mulf %2, %2 : vector<648x128xf32>
    %cst_9 = arith.constant dense<0.000000e+00> : vector<128xf32>
    %10 = vector.multi_reduction <add>, %9, %cst_9 [0] : vector<648x128xf32> to vector<128xf32>
    %11 = vector.shape_cast %10 : vector<128xf32> to vector<1x128xf32>
    %12 = vector.shape_cast %11 : vector<1x128xf32> to vector<1x1x128xf32>
    %c0_10 = arith.constant 0 : index
    %c0_11 = arith.constant 0 : index
    %c0_12 = arith.constant 0 : index
    %13 = vector.load %arg6[%c0_10, %c0_11, %c0_12] : memref<1x1x128xf32, #tpu.memory_space<vmem>>, vector<1x1x128xf32>
    tpu.vector_store %arg6[%c0_10, %c0_11, %c0_12], %12 {strides = array<i32>} : memref<1x1x128xf32, #tpu.memory_space<vmem>>, vector<1x1x128xf32>,
    return
  }
  func.func @transform_0(%arg0: i32, %arg1: i32) -> (i32, i32) {
    %c0_i32 = arith.constant 0 : i32
    %c0_i32_0 = arith.constant 0 : i32
    return %arg0, %c0_i32 : i32, i32
  }
  func.func @transform_1(%arg0: i32, %arg1: i32) -> (i32, i32) {
    %c0_i32 = arith.constant 0 : i32
    %c0_i32_0 = arith.constant 0 : i32
    return %c0_i32, %arg1 : i32, i32
  }
  func.func @transform_2(%arg0: i32, %arg1: i32) -> (i32, i32) {
    %c0_i32 = arith.constant 0 : i32
    return %arg0, %arg1 : i32, i32
  }
  func.func @transform_3(%arg0: i32, %arg1: i32) -> (i32, i32, i32) {
    %c0_i32 = arith.constant 0 : i32
    %c0_i32_0 = arith.constant 0 : i32
    return %arg0, %c0_i32, %arg1 : i32, i32, i32
  }
  func.func @transform_4(%arg0: i32, %arg1: i32) -> (i32, i32, i32) {
    %c0_i32 = arith.constant 0 : i32
    %c0_i32_0 = arith.constant 0 : i32
    return %arg0, %c0_i32, %arg1 : i32, i32, i32
  }
}

</mosaic_0001>

<llo_original>
// kernel: tpu_custom_call.1
$region0: #{tpu_custom_call.1}
  #allocation0 [shape = 'u32[]', space=smem, size = 0x4, offset = 0x4, fixed_abs, tag = 'smem constant byte address 0x4 - core index']
  #allocation1 [shape = 'u32[144,128]{1,0:T(1,128)}', space=vmem, size = 0x12000, scoped, tag = 'internal scratch']
  %s0 = inlined_call_operand.hbm [shape: bf16[648,128], index: 0, kind: input, shape index: {}]
  %s1 = inlined_call_operand.hbm [shape: bf16[128,128], index: 1, kind: input, shape index: {}]
  %s2 = inlined_call_operand.hbm [shape: bf16[648,128], index: 2, kind: output, shape index: {0}]
  %s3 = inlined_call_operand.hbm [shape: f32[1,1,128], index: 3, kind: output, shape index: {1}]
  %s4 = inlined_call_operand.hbm [shape: f32[1,1,128], index: 4, kind: output, shape index: {2}]
  %5 = xla_tuple %s2, %s3, %s4
  %s6 = sld [smem:[#allocation0]]
  $region42: #{tpu_custom_call.1} parent=0
    _
  %s8 = ssub.s32 1, %s6
  %s9 = scalar_select 0, %s8, %s6
  $region1: #{tpu_custom_call.1} parent=0
    #allocation2 [shape = 'u8[165888]{0}', space=vmem, size = 0x28800, scoped, tag = 'input window, operand 0, single buffered']
    #allocation3 [shape = 's32[1]{0}', space=sflag, size = 0x4, scoped, tag = 'scoped memory for tpu_custom_call.1']
    #allocation4 [shape = 's32[1]{0}', space=sflag, size = 0x4, scoped, tag = 'scoped memory for tpu_custom_call.1']
    #allocation5 [shape = 'u8[32768]{0}', space=vmem, size = 0x8000, scoped, tag = 'input window, operand 1, single buffered']
    #allocation6 [shape = 's32[1]{0}', space=sflag, size = 0x4, scoped, tag = 'scoped memory for tpu_custom_call.1']
    #allocation7 [shape = 'u8[165888]{0}', space=vmem, size = 0x28800, scoped, tag = 'output window, operand 0, single buffered']
    #allocation8 [shape = 'u8[512]{0}', space=vmem, size = 0x400, scoped, tag = 'output window, operand 1, single buffered']
    #allocation9 [shape = 's32[1]{0}', space=sflag, size = 0x4, scoped, tag = 'scoped memory for tpu_custom_call.1']
    #allocation10 [shape = 'u8[512]{0}', space=vmem, size = 0x400, scoped, tag = 'output window, operand 2, single buffered']
    %10 = vsyncpa [#allocation3], 0
    %11 = vsyncpa [#allocation6], 0
    %12 = vsyncpa [#allocation4], 0
    %13 = vsyncpa [#allocation9], 0
    // Predicated region
    $region2: #{tpu_custom_call.1} parent=1 // pred_check
      _
    $region3: #{tpu_custom_call.1} parent=1 // pred_check_branch
      %15 = sbr.rel (0) target = $region5
    $region4: #{tpu_custom_call.1} parent=1 // pred_region
      %s17 = ssub.s32 5184, 5184
      %18 = vsyncadd [#allocation3], %s17
      %s19 = sshll.u32 [#allocation2], 4
      %s20 = int_to_ptr.vmem [resolvable:$true] %s19
      %25 = dma.hbm_to_vmem [thread:$0]  %s0, 5184, %s20, [#allocation3], 64, 64, 4
    $region5: #{tpu_custom_call.1} parent=1 // pred_fallthru
      _
    // Predicated region
    $region6: #{tpu_custom_call.1} parent=1 // pred_check
      _
    $region7: #{tpu_custom_call.1} parent=1 // pred_check_branch
      %27 = sbr.rel (0) target = $region9
    $region8: #{tpu_custom_call.1} parent=1 // pred_region
      %s29 = ssub.s32 1024, 1024
      %30 = vsyncadd [#allocation6], %s29
      %s31 = sshll.u32 [#allocation5], 4
      %s32 = int_to_ptr.vmem [resolvable:$true] %s31
      %37 = dma.hbm_to_vmem [thread:$0]  %s1, 1024, %s32, [#allocation6], 64, 64, 4
    $region9: #{tpu_custom_call.1} parent=1 // pred_fallthru
      _
    // Predicated region
    $region10: #{tpu_custom_call.1} parent=1 // pred_check
      _
    $region11: #{tpu_custom_call.1} parent=1 // pred_check_branch
      %39 = sbr.rel (0) target = $region13
    $region12: #{tpu_custom_call.1} parent=1 // pred_region
      %40 = dma.done [#allocation3], 5184
    $region13: #{tpu_custom_call.1} parent=1 // pred_fallthru
      _
    // Predicated region
    $region14: #{tpu_custom_call.1} parent=1 // pred_check
      _
    $region15: #{tpu_custom_call.1} parent=1 // pred_check_branch
      %42 = sbr.rel (0) target = $region17
    $region16: #{tpu_custom_call.1} parent=1 // pred_region
      %43 = dma.done [#allocation6], 1024
    $region17: #{tpu_custom_call.1} parent=1 // pred_fallthru
      _
    %v45 = vld [vmem:[#allocation2] sm:$0xf]
    %v46 = vld [vmem:[#allocation2 + $0x4] sm:$0xf]
    %v47 = vld [vmem:[#allocation2 + $0x8] sm:$0xf]
    %v48 = vld [vmem:[#allocation2 + $0xc] sm:$0xf]
    %v49 = vld [vmem:[#allocation2 + $0x10] sm:$0xf]
    %v50 = vld [vmem:[#allocation2 + $0x14] sm:$0xf]
    %v51 = vld [vmem:[#allocation2 + $0x18] sm:$0xf]
    %v52 = vld [vmem:[#allocation2 + $0x1c] sm:$0xf]
    %v53 = vld [vmem:[#allocation2 + $0x20] sm:$0xf]
    %v54 = vld [vmem:[#allocation2 + $0x24] sm:$0xf]
    %v55 = vld [vmem:[#allocation2 + $0x28] sm:$0xf]
    %v56 = vld [vmem:[#allocation2 + $0x2c] sm:$0xf]
    %v57 = vld [vmem:[#allocation2 + $0x30] sm:$0xf]
    %v58 = vld [vmem:[#allocation2 + $0x34] sm:$0xf]
    %v59 = vld [vmem:[#allocation2 + $0x38] sm:$0xf]
    %v60 = vld [vmem:[#allocation2 + $0x3c] sm:$0xf]
    %v61 = vld [vmem:[#allocation2 + $0x40] sm:$0xf]
    %v62 = vld [vmem:[#allocation2 + $0x44] sm:$0xf]
    %v63 = vld [vmem:[#allocation2 + $0x48] sm:$0xf]
    %v64 = vld [vmem:[#allocation2 + $0x4c] sm:$0xf]
    %v65 = vld [vmem:[#allocation2 + $0x50] sm:$0xf]
    %v66 = vld [vmem:[#allocation2 + $0x54] sm:$0xf]
    %v67 = vld [vmem:[#allocation2 + $0x58] sm:$0xf]
    %v68 = vld [vmem:[#allocation2 + $0x5c] sm:$0xf]
    %v69 = vld [vmem:[#allocation2 + $0x60] sm:$0xf]
    %v70 = vld [vmem:[#allocation2 + $0x64] sm:$0xf]
    %v71 = vld [vmem:[#allocation2 + $0x68] sm:$0xf]
    %v72 = vld [vmem:[#allocation2 + $0x6c] sm:$0xf]
    %v73 = vld [vmem:[#allocation2 + $0x70] sm:$0xf]
    %v74 = vld [vmem:[#allocation2 + $0x74] sm:$0xf]
    %v75 = vld [vmem:[#allocation2 + $0x78] sm:$0xf]
    %v76 = vld [vmem:[#allocation2 + $0x7c] sm:$0xf]
    %v77 = vld [vmem:[#allocation2 + $0x80] sm:$0xf]
    %v78 = vld [vmem:[#allocation2 + $0x84] sm:$0xf]
    %v79 = vld [vmem:[#allocation2 + $0x88] sm:$0xf]
    %v80 = vld [vmem:[#allocation2 + $0x8c] sm:$0xf]
    %v81 = vld [vmem:[#allocation2 + $0x90] sm:$0xf]
    %v82 = vld [vmem:[#allocation2 + $0x94] sm:$0xf]
    %v83 = vld [vmem:[#allocation2 + $0x98] sm:$0xf]
    %v84 = vld [vmem:[#allocation2 + $0x9c] sm:$0xf]
    %v85 = vld [vmem:[#allocation2 + $0xa0] sm:$0xf]
    %v86 = vld [vmem:[#allocation2 + $0xa4] sm:$0xf]
    %v87 = vld [vmem:[#allocation2 + $0xa8] sm:$0xf]
    %v88 = vld [vmem:[#allocation2 + $0xac] sm:$0xf]
    %v89 = vld [vmem:[#allocation2 + $0xb0] sm:$0xf]
    %v90 = vld [vmem:[#allocation2 + $0xb4] sm:$0xf]
    %v91 = vld [vmem:[#allocation2 + $0xb8] sm:$0xf]
    %v92 = vld [vmem:[#allocation2 + $0xbc] sm:$0xf]
    %v93 = vld [vmem:[#allocation2 + $0xc0] sm:$0xf]
    %v94 = vld [vmem:[#allocation2 + $0xc4] sm:$0xf]
    %v95 = vld [vmem:[#allocation2 + $0xc8] sm:$0xf]
    %v96 = vld [vmem:[#allocation2 + $0xcc] sm:$0xf]
    %v97 = vld [vmem:[#allocation2 + $0xd0] sm:$0xf]
    %v98 = vld [vmem:[#allocation2 + $0xd4] sm:$0xf]
    %v99 = vld [vmem:[#allocation2 + $0xd8] sm:$0xf]
    %v100 = vld [vmem:[#allocation2 + $0xdc] sm:$0xf]
    %v101 = vld [vmem:[#allocation2 + $0xe0] sm:$0xf]
    %v102 = vld [vmem:[#allocation2 + $0xe4] sm:$0xf]
    %v103 = vld [vmem:[#allocation2 + $0xe8] sm:$0xf]
    %v104 = vld [vmem:[#allocation2 + $0xec] sm:$0xf]
    %v105 = vld [vmem:[#allocation2 + $0xf0] sm:$0xf]
    %v106 = vld [vmem:[#allocation2 + $0xf4] sm:$0xf]
    %v107 = vld [vmem:[#allocation2 + $0xf8] sm:$0xf]
    %v108 = vld [vmem:[#allocation2 + $0xfc] sm:$0xf]
    %v109 = vld [vmem:[#allocation2 + $0x100] sm:$0xf]
    %v110 = vld [vmem:[#allocation2 + $0x104] sm:$0xf]
    %v111 = vld [vmem:[#allocation2 + $0x108] sm:$0xf]
    %v112 = vld [vmem:[#allocation2 + $0x10c] sm:$0xf]
    %v113 = vld [vmem:[#allocation2 + $0x110] sm:$0xf]
    %v114 = vld [vmem:[#allocation2 + $0x114] sm:$0xf]
    %v115 = vld [vmem:[#allocation2 + $0x118] sm:$0xf]
    %v116 = vld [vmem:[#allocation2 + $0x11c] sm:$0xf]
    %v117 = vld [vmem:[#allocation2 + $0x120] sm:$0xf]
    %v118 = vld [vmem:[#allocation2 + $0x124] sm:$0xf]
    %v119 = vld [vmem:[#allocation2 + $0x128] sm:$0xf]
    %v120 = vld [vmem:[#allocation2 + $0x12c] sm:$0xf]
    %v121 = vld [vmem:[#allocation2 + $0x130] sm:$0xf]
    %v122 = vld [vmem:[#allocation2 + $0x134] sm:$0xf]
    %v123 = vld [vmem:[#allocation2 + $0x138] sm:$0xf]
    %v124 = vld [vmem:[#allocation2 + $0x13c] sm:$0xf]
    %v125 = vld [vmem:[#allocation2 + $0x140] sm:$0xf]
    %v126 = vld [vmem:[#allocation5] sm:$0xf]
    %v127 = vld [vmem:[#allocation5 + $0x4] sm:$0xf]
    %v128 = vld [vmem:[#allocation5 + $0x8] sm:$0xf]
    %v129 = vld [vmem:[#allocation5 + $0xc] sm:$0xf]
    %v130 = vld [vmem:[#allocation5 + $0x10] sm:$0xf]
    %v131 = vld [vmem:[#allocation5 + $0x14] sm:$0xf]
    %v132 = vld [vmem:[#allocation5 + $0x18] sm:$0xf]
    %v133 = vld [vmem:[#allocation5 + $0x1c] sm:$0xf]
    %v134 = vld [vmem:[#allocation5 + $0x20] sm:$0xf]
    %v135 = vld [vmem:[#allocation5 + $0x24] sm:$0xf]
    %v136 = vld [vmem:[#allocation5 + $0x28] sm:$0xf]
    %v137 = vld [vmem:[#allocation5 + $0x2c] sm:$0xf]
    %v138 = vld [vmem:[#allocation5 + $0x30] sm:$0xf]
    %v139 = vld [vmem:[#allocation5 + $0x34] sm:$0xf]
    %v140 = vld [vmem:[#allocation5 + $0x38] sm:$0xf]
    %v141 = vld [vmem:[#allocation5 + $0x3c] sm:$0xf]
    %v223 = vunpack.c.l.b16 %v45
    %v224 = vunpack.c.l.b16 %v46
    %v225 = vunpack.c.l.b16 %v47
    %v226 = vunpack.c.l.b16 %v48
    %v227 = vunpack.c.l.b16 %v49
    %v228 = vunpack.c.l.b16 %v50
    %v229 = vunpack.c.l.b16 %v51
    %v230 = vunpack.c.l.b16 %v52
    %v231 = vunpack.c.l.b16 %v53
    %v232 = vunpack.c.l.b16 %v54
    %v233 = vunpack.c.l.b16 %v55
    %v234 = vunpack.c.l.b16 %v56
    %v235 = vunpack.c.l.b16 %v57
    %v236 = vunpack.c.l.b16 %v58
    %v237 = vunpack.c.l.b16 %v59
    %v238 = vunpack.c.l.b16 %v60
    %v239 = vunpack.c.l.b16 %v61
    %v240 = vunpack.c.l.b16 %v62
    %v241 = vunpack.c.l.b16 %v63
    %v242 = vunpack.c.l.b16 %v64
    %v243 = vunpack.c.l.b16 %v65
    %v244 = vunpack.c.l.b16 %v66
    %v245 = vunpack.c.l.b16 %v67
    %v246 = vunpack.c.l.b16 %v68
    %v247 = vunpack.c.l.b16 %v69
    %v248 = vunpack.c.l.b16 %v70
    %v249 = vunpack.c.l.b16 %v71
    %v250 = vunpack.c.l.b16 %v72
    %v251 = vunpack.c.l.b16 %v73
    %v252 = vunpack.c.l.b16 %v74
    %v253 = vunpack.c.l.b16 %v75
    %v254 = vunpack.c.l.b16 %v76
    %v255 = vunpack.c.l.b16 %v77
    %v256 = vunpack.c.l.b16 %v78
    %v257 = vunpack.c.l.b16 %v79
    %v258 = vunpack.c.l.b16 %v80
    %v259 = vunpack.c.l.b16 %v81
    %v260 = vunpack.c.l.b16 %v82
    %v261 = vunpack.c.l.b16 %v83
    %v262 = vunpack.c.l.b16 %v84
    %v263 = vunpack.c.l.b16 %v85
    %v264 = vunpack.c.l.b16 %v86
    %v265 = vunpack.c.l.b16 %v87
    %v266 = vunpack.c.l.b16 %v88
    %v267 = vunpack.c.l.b16 %v89
    %v268 = vunpack.c.l.b16 %v90
    %v269 = vunpack.c.l.b16 %v91
    %v270 = vunpack.c.l.b16 %v92
    %v271 = vunpack.c.l.b16 %v93
    %v272 = vunpack.c.l.b16 %v94
    %v273 = vunpack.c.l.b16 %v95
    %v274 = vunpack.c.l.b16 %v96
    %v275 = vunpack.c.l.b16 %v97
    %v276 = vunpack.c.l.b16 %v98
    %v277 = vunpack.c.l.b16 %v99
    %v278 = vunpack.c.l.b16 %v100
    %v279 = vunpack.c.l.b16 %v101
    %v280 = vunpack.c.l.b16 %v102
    %v281 = vunpack.c.l.b16 %v103
    %v282 = vunpack.c.l.b16 %v104
    %v283 = vunpack.c.l.b16 %v105
    %v284 = vunpack.c.l.b16 %v106
    %v285 = vunpack.c.l.b16 %v107
    %v286 = vunpack.c.l.b16 %v108
    %v287 = vunpack.c.l.b16 %v109
    %v288 = vunpack.c.l.b16 %v110
    %v289 = vunpack.c.l.b16 %v111
    %v290 = vunpack.c.l.b16 %v112
    %v291 = vunpack.c.l.b16 %v113
    %v292 = vunpack.c.l.b16 %v114
    %v293 = vunpack.c.l.b16 %v115
    %v294 = vunpack.c.l.b16 %v116
    %v295 = vunpack.c.l.b16 %v117
    %v296 = vunpack.c.l.b16 %v118
    %v297 = vunpack.c.l.b16 %v119
    %v298 = vunpack.c.l.b16 %v120
    %v299 = vunpack.c.l.b16 %v121
    %v300 = vunpack.c.l.b16 %v122
    %v301 = vunpack.c.l.b16 %v123
    %v302 = vunpack.c.l.b16 %v124
    %v303 = vunpack.c.l.b16 %v125
    %v304 = vpack.c.b16 %v224, %v223
    %v305 = vpack.c.b16 %v226, %v225
    %v306 = vpack.c.b16 %v228, %v227
    %v307 = vpack.c.b16 %v230, %v229
    %v308 = vpack.c.b16 %v232, %v231
    %v309 = vpack.c.b16 %v234, %v233
    %v310 = vpack.c.b16 %v236, %v235
    %v311 = vpack.c.b16 %v238, %v237
    %v312 = vpack.c.b16 %v240, %v239
    %v313 = vpack.c.b16 %v242, %v241
    %v314 = vpack.c.b16 %v244, %v243
    %v315 = vpack.c.b16 %v246, %v245
    %v316 = vpack.c.b16 %v248, %v247
    %v317 = vpack.c.b16 %v250, %v249
    %v318 = vpack.c.b16 %v252, %v251
    %v319 = vpack.c.b16 %v254, %v253
    %v320 = vpack.c.b16 %v256, %v255
    %v321 = vpack.c.b16 %v258, %v257
    %v322 = vpack.c.b16 %v260, %v259
    %v323 = vpack.c.b16 %v262, %v261
    %v324 = vpack.c.b16 %v264, %v263
    %v325 = vpack.c.b16 %v266, %v265
    %v326 = vpack.c.b16 %v268, %v267
    %v327 = vpack.c.b16 %v270, %v269
    %v328 = vpack.c.b16 %v272, %v271
    %v329 = vpack.c.b16 %v274, %v273
    %v330 = vpack.c.b16 %v276, %v275
    %v331 = vpack.c.b16 %v278, %v277
    %v332 = vpack.c.b16 %v280, %v279
    %v333 = vpack.c.b16 %v282, %v281
    %v334 = vpack.c.b16 %v284, %v283
    %v335 = vpack.c.b16 %v286, %v285
    %v336 = vpack.c.b16 %v288, %v287
    %v337 = vpack.c.b16 %v290, %v289
    %v338 = vpack.c.b16 %v292, %v291
    %v339 = vpack.c.b16 %v294, %v293
    %v340 = vpack.c.b16 %v296, %v295
    %v341 = vpack.c.b16 %v298, %v297
    %v342 = vpack.c.b16 %v300, %v299
    %v343 = vpack.c.b16 %v302, %v301
    %v344 = vpack.c.b16 %v303, %v303
    %v402 = vunpack.c.l.b16 %v126
    %v403 = vunpack.c.l.b16 %v127
    %v404 = vunpack.c.l.b16 %v128
    %v405 = vunpack.c.l.b16 %v129
    %v406 = vunpack.c.l.b16 %v130
    %v407 = vunpack.c.l.b16 %v131
    %v408 = vunpack.c.l.b16 %v132
    %v409 = vunpack.c.l.b16 %v133
    %v410 = vunpack.c.l.b16 %v134
    %v411 = vunpack.c.l.b16 %v135
    %v412 = vunpack.c.l.b16 %v136
    %v413 = vunpack.c.l.b16 %v137
    %v414 = vunpack.c.l.b16 %v138
    %v415 = vunpack.c.l.b16 %v139
    %v416 = vunpack.c.l.b16 %v140
    %v417 = vunpack.c.l.b16 %v141
    %v418 = vpack.c.b16 %v403, %v402
    %v419 = vpack.c.b16 %v405, %v404
    %v420 = vpack.c.b16 %v407, %v406
    %v421 = vpack.c.b16 %v409, %v408
    %v422 = vpack.c.b16 %v411, %v410
    %v423 = vpack.c.b16 %v413, %v412
    %v424 = vpack.c.b16 %v415, %v414
    %v425 = vpack.c.b16 %v417, %v416
    %434 = vmatprep.subr.bf16.mxu0 0
    %435 = vmatpush1.bf16.msra.mxu0 %v418
    %436 = vmatprep.subr.bf16.mxu0 0
    %437 = vmatpush1.bf16.msra.mxu0 %v419
    %438 = vmatprep.subr.bf16.mxu0 0
    %439 = vmatpush1.bf16.msra.mxu0 %v420
    %440 = vmatprep.subr.bf16.mxu0 0
    %441 = vmatpush1.bf16.msra.mxu0 %v421
    %442 = vmatprep.subr.bf16.mxu0 0
    %443 = vmatpush1.bf16.msra.mxu0 %v422
    %444 = vmatprep.subr.bf16.mxu0 0
    %445 = vmatpush1.bf16.msra.mxu0 %v423
    %446 = vmatprep.subr.bf16.mxu0 0
    %447 = vmatpush1.bf16.msra.mxu0 %v424
    %448 = vmatprep.subr.bf16.mxu0 0
    %449 = vmatpush1.bf16.msra.mxu0 %v425
    %450 = vmatprep.subr.bf16.mxu0 0
    %451 = vmatpush1.bf16.msra.mxu0 0
    %452 = vmatprep.subr.bf16.mxu0 0
    %453 = vmatpush1.bf16.msra.mxu0 0
    %454 = vmatprep.subr.bf16.mxu0 0
    %455 = vmatpush1.bf16.msra.mxu0 0
    %456 = vmatprep.subr.bf16.mxu0 0
    %457 = vmatpush1.bf16.msra.mxu0 0
    %458 = vmatprep.subr.bf16.mxu0 0
    %459 = vmatpush1.bf16.msra.mxu0 0
    %460 = vmatprep.subr.bf16.mxu0 0
    %461 = vmatpush1.bf16.msra.mxu0 0
    %462 = vmatprep.subr.bf16.mxu0 0
    %463 = vmatpush1.bf16.msra.mxu0 0
    %464 = vmatprep.subr.bf16.mxu0 0
    %465 = vmatpush1.bf16.msra.mxu0 0
    %466 = vmatprep.mubr.bf16.mxu0 0
    %467 = vmatmul.mubr.bf16.gmra.mrb[0].mxu0 %v304
    %v468 = vpop.f32.mrb[0].mxu0
    %v469 = vadd.f32 0.0, %v468
    %v470 = vpop.f32.mrb[0].mxu0
    %v471 = vpop.f32.mrb[0].mxu0
    %v472 = vadd.f32 0.0, %v471
    %v473 = vpop.f32.mrb[0].mxu0
    %474 = vmatprep.mubr.bf16.mxu0 0
    %475 = vmatmul.mubr.bf16.gmra.mrb[0].mxu0 %v305
    %v476 = vpop.f32.mrb[0].mxu0
    %v477 = vadd.f32 0.0, %v476
    %v478 = vpop.f32.mrb[0].mxu0
    %v479 = vpop.f32.mrb[0].mxu0
    %v480 = vadd.f32 0.0, %v479
    %v481 = vpop.f32.mrb[0].mxu0
    %482 = vmatprep.mubr.bf16.mxu0 0
    %483 = vmatmul.mubr.bf16.gmra.mrb[0].mxu0 %v306
    %v484 = vpop.f32.mrb[0].mxu0
    %v485 = vadd.f32 0.0, %v484
    %v486 = vpop.f32.mrb[0].mxu0
    %v487 = vpop.f32.mrb[0].mxu0
    %v488 = vadd.f32 0.0, %v487
    %v489 = vpop.f32.mrb[0].mxu0
    %490 = vmatprep.mubr.bf16.mxu0 0
    %491 = vmatmul.mubr.bf16.gmra.mrb[0].mxu0 %v307
    %v492 = vpop.f32.mrb[0].mxu0
    %v493 = vadd.f32 0.0, %v492
    %v494 = vpop.f32.mrb[0].mxu0
    %v495 = vpop.f32.mrb[0].mxu0
    %v496 = vadd.f32 0.0, %v495
    %v497 = vpop.f32.mrb[0].mxu0
    %498 = vmatprep.mubr.bf16.mxu0 0
    %499 = vmatmul.mubr.bf16.gmra.mrb[0].mxu0 %v308
    %v500 = vpop.f32.mrb[0].mxu0
    %v501 = vadd.f32 0.0, %v500
    %v502 = vpop.f32.mrb[0].mxu0
    %v503 = vpop.f32.mrb[0].mxu0
    %v504 = vadd.f32 0.0, %v503
    %v505 = vpop.f32.mrb[0].mxu0
    %506 = vmatprep.mubr.bf16.mxu0 0
    %507 = vmatmul.mubr.bf16.gmra.mrb[0].mxu0 %v309
    %v508 = vpop.f32.mrb[0].mxu0
    %v509 = vadd.f32 0.0, %v508
    %v510 = vpop.f32.mrb[0].mxu0
    %v511 = vpop.f32.mrb[0].mxu0
    %v512 = vadd.f32 0.0, %v511
    %v513 = vpop.f32.mrb[0].mxu0
    %514 = vmatprep.mubr.bf16.mxu0 0
    %515 = vmatmul.mubr.bf16.gmra.mrb[0].mxu0 %v310
    %v516 = vpop.f32.mrb[0].mxu0
    %v517 = vadd.f32 0.0, %v516
    %v518 = vpop.f32.mrb[0].mxu0
    %v519 = vpop.f32.mrb[0].mxu0
    %v520 = vadd.f32 0.0, %v519
    %v521 = vpop.f32.mrb[0].mxu0
    %522 = vmatprep.mubr.bf16.mxu0 0
    %523 = vmatmul.mubr.bf16.gmra.mrb[0].mxu0 %v311
    %v524 = vpop.f32.mrb[0].mxu0
    %v525 = vadd.f32 0.0, %v524
    %v526 = vpop.f32.mrb[0].mxu0
    %v527 = vpop.f32.mrb[0].mxu0
    %v528 = vadd.f32 0.0, %v527
    %v529 = vpop.f32.mrb[0].mxu0
    %530 = vmatprep.mubr.bf16.mxu0 0
    %531 = vmatmul.mubr.bf16.gmra.mrb[0].mxu0 %v312
    %v532 = vpop.f32.mrb[0].mxu0
    %v533 = vadd.f32 0.0, %v532
    %v534 = vpop.f32.mrb[0].mxu0
    %v535 = vpop.f32.mrb[0].mxu0
    %v536 = vadd.f32 0.0, %v535
    %v537 = vpop.f32.mrb[0].mxu0
    %538 = vmatprep.mubr.bf16.mxu0 0
    %539 = vmatmul.mubr.bf16.gmra.mrb[0].mxu0 %v313
    %v540 = vpop.f32.mrb[0].mxu0
    %v541 = vadd.f32 0.0, %v540
    %v542 = vpop.f32.mrb[0].mxu0
    %v543 = vpop.f32.mrb[0].mxu0
    %v544 = vadd.f32 0.0, %v543
    %v545 = vpop.f32.mrb[0].mxu0
    %546 = vmatprep.mubr.bf16.mxu0 0
    %547 = vmatmul.mubr.bf16.gmra.mrb[0].mxu0 %v314
    %v548 = vpop.f32.mrb[0].mxu0
    %v549 = vadd.f32 0.0, %v548
    %v550 = vpop.f32.mrb[0].mxu0
    %v551 = vpop.f32.mrb[0].mxu0
    %v552 = vadd.f32 0.0, %v551
    %v553 = vpop.f32.mrb[0].mxu0
    %554 = vmatprep.mubr.bf16.mxu0 0
    %555 = vmatmul.mubr.bf16.gmra.mrb[0].mxu0 %v315
    %v556 = vpop.f32.mrb[0].mxu0
    %v557 = vadd.f32 0.0, %v556
    %v558 = vpop.f32.mrb[0].mxu0
    %v559 = vpop.f32.mrb[0].mxu0
    %v560 = vadd.f32 0.0, %v559
    %v561 = vpop.f32.mrb[0].mxu0
    %562 = vmatprep.mubr.bf16.mxu0 0
    %563 = vmatmul.mubr.bf16.gmra.mrb[0].mxu0 %v316
    %v564 = vpop.f32.mrb[0].mxu0
    %v565 = vadd.f32 0.0, %v564
    %v566 = vpop.f32.mrb[0].mxu0
    %v567 = vpop.f32.mrb[0].mxu0
    %v568 = vadd.f32 0.0, %v567
    %v569 = vpop.f32.mrb[0].mxu0
    %570 = vmatprep.mubr.bf16.mxu0 0
    %571 = vmatmul.mubr.bf16.gmra.mrb[0].mxu0 %v317
    %v572 = vpop.f32.mrb[0].mxu0
    %v573 = vadd.f32 0.0, %v572
    %v574 = vpop.f32.mrb[0].mxu0
    %v575 = vpop.f32.mrb[0].mxu0
    %v576 = vadd.f32 0.0, %v575
    %v577 = vpop.f32.mrb[0].mxu0
    %578 = vmatprep.mubr.bf16.mxu0 0
    %579 = vmatmul.mubr.bf16.gmra.mrb[0].mxu0 %v318
    %v580 = vpop.f32.mrb[0].mxu0
    %v581 = vadd.f32 0.0, %v580
    %v582 = vpop.f32.mrb[0].mxu0
    %v583 = vpop.f32.mrb[0].mxu0
    %v584 = vadd.f32 0.0, %v583
    %v585 = vpop.f32.mrb[0].mxu0
    %586 = vmatprep.mubr.bf16.mxu0 0
    %587 = vmatmul.mubr.bf16.gmra.mrb[0].mxu0 %v319
    %v588 = vpop.f32.mrb[0].mxu0
    %v589 = vadd.f32 0.0, %v588
    %v590 = vpop.f32.mrb[0].mxu0
    %v591 = vpop.f32.mrb[0].mxu0
    %v592 = vadd.f32 0.0, %v591
    %v593 = vpop.f32.mrb[0].mxu0
    %594 = vmatprep.mubr.bf16.mxu0 0
    %595 = vmatmul.mubr.bf16.gmra.mrb[0].mxu0 %v320
    %v596 = vpop.f32.mrb[0].mxu0
    %v597 = vadd.f32 0.0, %v596
    %v598 = vpop.f32.mrb[0].mxu0
    %v599 = vpop.f32.mrb[0].mxu0
    %v600 = vadd.f32 0.0, %v599
    %v601 = vpop.f32.mrb[0].mxu0
    %602 = vmatprep.mubr.bf16.mxu0 0
    %603 = vmatmul.mubr.bf16.gmra.mrb[0].mxu0 %v321
    %v604 = vpop.f32.mrb[0].mxu0
    %v605 = vadd.f32 0.0, %v604
    %v606 = vpop.f32.mrb[0].mxu0
    %v607 = vpop.f32.mrb[0].mxu0
    %v608 = vadd.f32 0.0, %v607
    %v609 = vpop.f32.mrb[0].mxu0
    %610 = vmatprep.mubr.bf16.mxu0 0
    %611 = vmatmul.mubr.bf16.gmra.mrb[0].mxu0 %v322
    %v612 = vpop.f32.mrb[0].mxu0
    %v613 = vadd.f32 0.0, %v612
    %v614 = vpop.f32.mrb[0].mxu0
    %v615 = vpop.f32.mrb[0].mxu0
    %v616 = vadd.f32 0.0, %v615
    %v617 = vpop.f32.mrb[0].mxu0
    %618 = vmatprep.mubr.bf16.mxu0 0
    %619 = vmatmul.mubr.bf16.gmra.mrb[0].mxu0 %v323
    %v620 = vpop.f32.mrb[0].mxu0
    %v621 = vadd.f32 0.0, %v620
    %v622 = vpop.f32.mrb[0].mxu0
    %v623 = vpop.f32.mrb[0].mxu0
    %v624 = vadd.f32 0.0, %v623
    %v625 = vpop.f32.mrb[0].mxu0
    %626 = vmatprep.mubr.bf16.mxu0 0
    %627 = vmatmul.mubr.bf16.gmra.mrb[0].mxu0 %v324
    %v628 = vpop.f32.mrb[0].mxu0
    %v629 = vadd.f32 0.0, %v628
    %v630 = vpop.f32.mrb[0].mxu0
    %v631 = vpop.f32.mrb[0].mxu0
    %v632 = vadd.f32 0.0, %v631
    %v633 = vpop.f32.mrb[0].mxu0
    %634 = vmatprep.mubr.bf16.mxu0 0
    %635 = vmatmul.mubr.bf16.gmra.mrb[0].mxu0 %v325
    %v636 = vpop.f32.mrb[0].mxu0
    %v637 = vadd.f32 0.0, %v636
    %v638 = vpop.f32.mrb[0].mxu0
    %v639 = vpop.f32.mrb[0].mxu0
    %v640 = vadd.f32 0.0, %v639
    %v641 = vpop.f32.mrb[0].mxu0
    %642 = vmatprep.mubr.bf16.mxu0 0
    %643 = vmatmul.mubr.bf16.gmra.mrb[0].mxu0 %v326
    %v644 = vpop.f32.mrb[0].mxu0
    %v645 = vadd.f32 0.0, %v644
    %v646 = vpop.f32.mrb[0].mxu0
    %v647 = vpop.f32.mrb[0].mxu0
    %v648 = vadd.f32 0.0, %v647
    %v649 = vpop.f32.mrb[0].mxu0
    %650 = vmatprep.mubr.bf16.mxu0 0
    %651 = vmatmul.mubr.bf16.gmra.mrb[0].mxu0 %v327
    %v652 = vpop.f32.mrb[0].mxu0
    %v653 = vadd.f32 0.0, %v652
    %v654 = vpop.f32.mrb[0].mxu0
    %v655 = vpop.f32.mrb[0].mxu0
    %v656 = vadd.f32 0.0, %v655
    %v657 = vpop.f32.mrb[0].mxu0
    %658 = vmatprep.mubr.bf16.mxu0 0
    %659 = vmatmul.mubr.bf16.gmra.mrb[0].mxu0 %v328
    %v660 = vpop.f32.mrb[0].mxu0
    %v661 = vadd.f32 0.0, %v660
    %v662 = vpop.f32.mrb[0].mxu0
    %v663 = vpop.f32.mrb[0].mxu0
    %v664 = vadd.f32 0.0, %v663
    %v665 = vpop.f32.mrb[0].mxu0
    %666 = vmatprep.mubr.bf16.mxu0 0
    %667 = vmatmul.mubr.bf16.gmra.mrb[0].mxu0 %v329
    %v668 = vpop.f32.mrb[0].mxu0
    %v669 = vadd.f32 0.0, %v668
    %v670 = vpop.f32.mrb[0].mxu0
    %v671 = vpop.f32.mrb[0].mxu0
    %v672 = vadd.f32 0.0, %v671
    %v673 = vpop.f32.mrb[0].mxu0
    %674 = vmatprep.mubr.bf16.mxu0 0
    %675 = vmatmul.mubr.bf16.gmra.mrb[0].mxu0 %v330
    %v676 = vpop.f32.mrb[0].mxu0
    %v677 = vadd.f32 0.0, %v676
    %v678 = vpop.f32.mrb[0].mxu0
    %v679 = vpop.f32.mrb[0].mxu0
    %v680 = vadd.f32 0.0, %v679
    %v681 = vpop.f32.mrb[0].mxu0
    %682 = vmatprep.mubr.bf16.mxu0 0
    %683 = vmatmul.mubr.bf16.gmra.mrb[0].mxu0 %v331
    %v684 = vpop.f32.mrb[0].mxu0
    %v685 = vadd.f32 0.0, %v684
    %v686 = vpop.f32.mrb[0].mxu0
    %v687 = vpop.f32.mrb[0].mxu0
    %v688 = vadd.f32 0.0, %v687
    %v689 = vpop.f32.mrb[0].mxu0
    %690 = vmatprep.mubr.bf16.mxu0 0
    %691 = vmatmul.mubr.bf16.gmra.mrb[0].mxu0 %v332
    %v692 = vpop.f32.mrb[0].mxu0
    %v693 = vadd.f32 0.0, %v692
    %v694 = vpop.f32.mrb[0].mxu0
    %v695 = vpop.f32.mrb[0].mxu0
    %v696 = vadd.f32 0.0, %v695
    %v697 = vpop.f32.mrb[0].mxu0
    %698 = vmatprep.mubr.bf16.mxu0 0
    %699 = vmatmul.mubr.bf16.gmra.mrb[0].mxu0 %v333
    %v700 = vpop.f32.mrb[0].mxu0
    %v701 = vadd.f32 0.0, %v700
    %v702 = vpop.f32.mrb[0].mxu0
    %v703 = vpop.f32.mrb[0].mxu0
    %v704 = vadd.f32 0.0, %v703
    %v705 = vpop.f32.mrb[0].mxu0
    %706 = vmatprep.mubr.bf16.mxu0 0
    %707 = vmatmul.mubr.bf16.gmra.mrb[0].mxu0 %v334
    %v708 = vpop.f32.mrb[0].mxu0
    %v709 = vadd.f32 0.0, %v708
    %v710 = vpop.f32.mrb[0].mxu0
    %v711 = vpop.f32.mrb[0].mxu0
    %v712 = vadd.f32 0.0, %v711
    %v713 = vpop.f32.mrb[0].mxu0
    %714 = vmatprep.mubr.bf16.mxu0 0
    %715 = vmatmul.mubr.bf16.gmra.mrb[0].mxu0 %v335
    %v716 = vpop.f32.mrb[0].mxu0
    %v717 = vadd.f32 0.0, %v716
    %v718 = vpop.f32.mrb[0].mxu0
    %v719 = vpop.f32.mrb[0].mxu0
    %v720 = vadd.f32 0.0, %v719
    %v721 = vpop.f32.mrb[0].mxu0
    %722 = vmatprep.mubr.bf16.mxu0 0
    %723 = vmatmul.mubr.bf16.gmra.mrb[0].mxu0 %v336
    %v724 = vpop.f32.mrb[0].mxu0
    %v725 = vadd.f32 0.0, %v724
    %v726 = vpop.f32.mrb[0].mxu0
    %v727 = vpop.f32.mrb[0].mxu0
    %v728 = vadd.f32 0.0, %v727
    %v729 = vpop.f32.mrb[0].mxu0
    %730 = vmatprep.mubr.bf16.mxu0 0
    %731 = vmatmul.mubr.bf16.gmra.mrb[0].mxu0 %v337
    %v732 = vpop.f32.mrb[0].mxu0
    %v733 = vadd.f32 0.0, %v732
    %v734 = vpop.f32.mrb[0].mxu0
    %v735 = vpop.f32.mrb[0].mxu0
    %v736 = vadd.f32 0.0, %v735
    %v737 = vpop.f32.mrb[0].mxu0
    %738 = vmatprep.mubr.bf16.mxu0 0
    %739 = vmatmul.mubr.bf16.gmra.mrb[0].mxu0 %v338
    %v740 = vpop.f32.mrb[0].mxu0
    %v741 = vadd.f32 0.0, %v740
    %v742 = vpop.f32.mrb[0].mxu0
    %v743 = vpop.f32.mrb[0].mxu0
    %v744 = vadd.f32 0.0, %v743
    %v745 = vpop.f32.mrb[0].mxu0
    %746 = vmatprep.mubr.bf16.mxu0 0
    %747 = vmatmul.mubr.bf16.gmra.mrb[0].mxu0 %v339
    %v748 = vpop.f32.mrb[0].mxu0
    %v749 = vadd.f32 0.0, %v748
    %v750 = vpop.f32.mrb[0].mxu0
    %v751 = vpop.f32.mrb[0].mxu0
    %v752 = vadd.f32 0.0, %v751
    %v753 = vpop.f32.mrb[0].mxu0
    %754 = vmatprep.mubr.bf16.mxu0 0
    %755 = vmatmul.mubr.bf16.gmra.mrb[0].mxu0 %v340
    %v756 = vpop.f32.mrb[0].mxu0
    %v757 = vadd.f32 0.0, %v756
    %v758 = vpop.f32.mrb[0].mxu0
    %v759 = vpop.f32.mrb[0].mxu0
    %v760 = vadd.f32 0.0, %v759
    %v761 = vpop.f32.mrb[0].mxu0
    %762 = vmatprep.mubr.bf16.mxu0 0
    %763 = vmatmul.mubr.bf16.gmra.mrb[0].mxu0 %v341
    %v764 = vpop.f32.mrb[0].mxu0
    %v765 = vadd.f32 0.0, %v764
    %v766 = vpop.f32.mrb[0].mxu0
    %v767 = vpop.f32.mrb[0].mxu0
    %v768 = vadd.f32 0.0, %v767
    %v769 = vpop.f32.mrb[0].mxu0
    %770 = vmatprep.mubr.bf16.mxu0 0
    %771 = vmatmul.mubr.bf16.gmra.mrb[0].mxu0 %v342
    %v772 = vpop.f32.mrb[0].mxu0
    %v773 = vadd.f32 0.0, %v772
    %v774 = vpop.f32.mrb[0].mxu0
    %v775 = vpop.f32.mrb[0].mxu0
    %v776 = vadd.f32 0.0, %v775
    %v777 = vpop.f32.mrb[0].mxu0
    %778 = vmatprep.mubr.bf16.mxu0 0
    %779 = vmatmul.mubr.bf16.gmra.mrb[0].mxu0 %v343
    %v780 = vpop.f32.mrb[0].mxu0
    %v781 = vadd.f32 0.0, %v780
    %v782 = vpop.f32.mrb[0].mxu0
    %v783 = vpop.f32.mrb[0].mxu0
    %v784 = vadd.f32 0.0, %v783
    %v785 = vpop.f32.mrb[0].mxu0
    %786 = vmatprep.mubr.bf16.mxu0 0
    %787 = vmatmul.mubr.bf16.gmra.mrb[0].mxu0 %v344
    %v788 = vpop.f32.mrb[0].mxu0
    %v789 = vadd.f32 0.0, %v788
    %v790 = vpop.f32.mrb[0].mxu0
    %v791 = vpop.f32.mrb[0].mxu0
    %v792 = vpop.f32.mrb[0].mxu0
    %793 = vdwg.mxu0
    %v794 = vpack.c.bf16 %v472, %v469
    %v795 = vpack.c.bf16 %v480, %v477
    %v796 = vpack.c.bf16 %v488, %v485
    %v797 = vpack.c.bf16 %v496, %v493
    %v798 = vpack.c.bf16 %v504, %v501
    %v799 = vpack.c.bf16 %v512, %v509
    %v800 = vpack.c.bf16 %v520, %v517
    %v801 = vpack.c.bf16 %v528, %v525
    %v802 = vpack.c.bf16 %v536, %v533
    %v803 = vpack.c.bf16 %v544, %v541
    %v804 = vpack.c.bf16 %v552, %v549
    %v805 = vpack.c.bf16 %v560, %v557
    %v806 = vpack.c.bf16 %v568, %v565
    %v807 = vpack.c.bf16 %v576, %v573
    %v808 = vpack.c.bf16 %v584, %v581
    %v809 = vpack.c.bf16 %v592, %v589
    %v810 = vpack.c.bf16 %v600, %v597
    %v811 = vpack.c.bf16 %v608, %v605
    %v812 = vpack.c.bf16 %v616, %v613
    %v813 = vpack.c.bf16 %v624, %v621
    %v814 = vpack.c.bf16 %v632, %v629
    %v815 = vpack.c.bf16 %v640, %v637
    %v816 = vpack.c.bf16 %v648, %v645
    %v817 = vpack.c.bf16 %v656, %v653
    %v818 = vpack.c.bf16 %v664, %v661
    %v819 = vpack.c.bf16 %v672, %v669
    %v820 = vpack.c.bf16 %v680, %v677
    %v821 = vpack.c.bf16 %v688, %v685
    %v822 = vpack.c.bf16 %v696, %v693
    %v823 = vpack.c.bf16 %v704, %v701
    %v824 = vpack.c.bf16 %v712, %v709
    %v825 = vpack.c.bf16 %v720, %v717
    %v826 = vpack.c.bf16 %v728, %v725
    %v827 = vpack.c.bf16 %v736, %v733
    %v828 = vpack.c.bf16 %v744, %v741
    %v829 = vpack.c.bf16 %v752, %v749
    %v830 = vpack.c.bf16 %v760, %v757
    %v831 = vpack.c.bf16 %v768, %v765
    %v832 = vpack.c.bf16 %v776, %v773
    %v833 = vpack.c.bf16 %v784, %v781
    %v834 = vpack.c.bf16 %v789, %v789
    %v876 = vunpack.c.l.b16 %v794
    %v877 = vunpack.c.h.b16 %v794
    %v878 = vunpack.c.l.b16 %v795
    %v879 = vunpack.c.h.b16 %v795
    %v880 = vunpack.c.l.b16 %v796
    %v881 = vunpack.c.h.b16 %v796
    %v882 = vunpack.c.l.b16 %v797
    %v883 = vunpack.c.h.b16 %v797
    %v884 = vunpack.c.l.b16 %v798
    %v885 = vunpack.c.h.b16 %v798
    %v886 = vunpack.c.l.b16 %v799
    %v887 = vunpack.c.h.b16 %v799
    %v888 = vunpack.c.l.b16 %v800
    %v889 = vunpack.c.h.b16 %v800
    %v890 = vunpack.c.l.b16 %v801
    %v891 = vunpack.c.h.b16 %v801
    %v892 = vunpack.c.l.b16 %v802
    %v893 = vunpack.c.h.b16 %v802
    %v894 = vunpack.c.l.b16 %v803
    %v895 = vunpack.c.h.b16 %v803
    %v896 = vunpack.c.l.b16 %v804
    %v897 = vunpack.c.h.b16 %v804
    %v898 = vunpack.c.l.b16 %v805
    %v899 = vunpack.c.h.b16 %v805
    %v900 = vunpack.c.l.b16 %v806
    %v901 = vunpack.c.h.b16 %v806
    %v902 = vunpack.c.l.b16 %v807
    %v903 = vunpack.c.h.b16 %v807
    %v904 = vunpack.c.l.b16 %v808
    %v905 = vunpack.c.h.b16 %v808
    %v906 = vunpack.c.l.b16 %v809
    %v907 = vunpack.c.h.b16 %v809
    %v908 = vunpack.c.l.b16 %v810
    %v909 = vunpack.c.h.b16 %v810
    %v910 = vunpack.c.l.b16 %v811
    %v911 = vunpack.c.h.b16 %v811
    %v912 = vunpack.c.l.b16 %v812
    %v913 = vunpack.c.h.b16 %v812
    %v914 = vunpack.c.l.b16 %v813
    %v915 = vunpack.c.h.b16 %v813
    %v916 = vunpack.c.l.b16 %v814
    %v917 = vunpack.c.h.b16 %v814
    %v918 = vunpack.c.l.b16 %v815
    %v919 = vunpack.c.h.b16 %v815
    %v920 = vunpack.c.l.b16 %v816
    %v921 = vunpack.c.h.b16 %v816
    %v922 = vunpack.c.l.b16 %v817
    %v923 = vunpack.c.h.b16 %v817
    %v924 = vunpack.c.l.b16 %v818
    %v925 = vunpack.c.h.b16 %v818
    %v926 = vunpack.c.l.b16 %v819
    %v927 = vunpack.c.h.b16 %v819
    %v928 = vunpack.c.l.b16 %v820
    %v929 = vunpack.c.h.b16 %v820
    %v930 = vunpack.c.l.b16 %v821
    %v931 = vunpack.c.h.b16 %v821
    %v932 = vunpack.c.l.b16 %v822
    %v933 = vunpack.c.h.b16 %v822
    %v934 = vunpack.c.l.b16 %v823
    %v935 = vunpack.c.h.b16 %v823
    %v936 = vunpack.c.l.b16 %v824
    %v937 = vunpack.c.h.b16 %v824
    %v938 = vunpack.c.l.b16 %v825
    %v939 = vunpack.c.h.b16 %v825
    %v940 = vunpack.c.l.b16 %v826
    %v941 = vunpack.c.h.b16 %v826
    %v942 = vunpack.c.l.b16 %v827
    %v943 = vunpack.c.h.b16 %v827
    %v944 = vunpack.c.l.b16 %v828
    %v945 = vunpack.c.h.b16 %v828
    %v946 = vunpack.c.l.b16 %v829
    %v947 = vunpack.c.h.b16 %v829
    %v948 = vunpack.c.l.b16 %v830
    %v949 = vunpack.c.h.b16 %v830
    %v950 = vunpack.c.l.b16 %v831
    %v951 = vunpack.c.h.b16 %v831
    %v952 = vunpack.c.l.b16 %v832
    %v953 = vunpack.c.h.b16 %v832
    %v954 = vunpack.c.l.b16 %v833
    %v955 = vunpack.c.h.b16 %v833
    %v956 = vunpack.c.l.b16 %v834
    %v957 = vpack.c.b16 %v876, %v876
    %v958 = vpack.c.b16 %v877, %v877
    %v959 = vpack.c.b16 %v878, %v878
    %v960 = vpack.c.b16 %v879, %v879
    %v961 = vpack.c.b16 %v880, %v880
    %v962 = vpack.c.b16 %v881, %v881
    %v963 = vpack.c.b16 %v882, %v882
    %v964 = vpack.c.b16 %v883, %v883
    %v965 = vpack.c.b16 %v884, %v884
    %v966 = vpack.c.b16 %v885, %v885
    %v967 = vpack.c.b16 %v886, %v886
    %v968 = vpack.c.b16 %v887, %v887
    %v969 = vpack.c.b16 %v888, %v888
    %v970 = vpack.c.b16 %v889, %v889
    %v971 = vpack.c.b16 %v890, %v890
    %v972 = vpack.c.b16 %v891, %v891
    %v973 = vpack.c.b16 %v892, %v892
    %v974 = vpack.c.b16 %v893, %v893
    %v975 = vpack.c.b16 %v894, %v894
    %v976 = vpack.c.b16 %v895, %v895
    %v977 = vpack.c.b16 %v896, %v896
    %v978 = vpack.c.b16 %v897, %v897
    %v979 = vpack.c.b16 %v898, %v898
    %v980 = vpack.c.b16 %v899, %v899
    %v981 = vpack.c.b16 %v900, %v900
    %v982 = vpack.c.b16 %v901, %v901
    %v983 = vpack.c.b16 %v902, %v902
    %v984 = vpack.c.b16 %v903, %v903
    %v985 = vpack.c.b16 %v904, %v904
    %v986 = vpack.c.b16 %v905, %v905
    %v987 = vpack.c.b16 %v906, %v906
    %v988 = vpack.c.b16 %v907, %v907
    %v989 = vpack.c.b16 %v908, %v908
    %v990 = vpack.c.b16 %v909, %v909
    %v991 = vpack.c.b16 %v910, %v910
    %v992 = vpack.c.b16 %v911, %v911
    %v993 = vpack.c.b16 %v912, %v912
    %v994 = vpack.c.b16 %v913, %v913
    %v995 = vpack.c.b16 %v914, %v914
    %v996 = vpack.c.b16 %v915, %v915
    %v997 = vpack.c.b16 %v916, %v916
    %v998 = vpack.c.b16 %v917, %v917
    %v999 = vpack.c.b16 %v918, %v918
    %v1000 = vpack.c.b16 %v919, %v919
    %v1001 = vpack.c.b16 %v920, %v920
    %v1002 = vpack.c.b16 %v921, %v921
    %v1003 = vpack.c.b16 %v922, %v922
    %v1004 = vpack.c.b16 %v923, %v923
    %v1005 = vpack.c.b16 %v924, %v924
    %v1006 = vpack.c.b16 %v925, %v925
    %v1007 = vpack.c.b16 %v926, %v926
    %v1008 = vpack.c.b16 %v927, %v927
    %v1009 = vpack.c.b16 %v928, %v928
    %v1010 = vpack.c.b16 %v929, %v929
    %v1011 = vpack.c.b16 %v930, %v930
    %v1012 = vpack.c.b16 %v931, %v931
    %v1013 = vpack.c.b16 %v932, %v932
    %v1014 = vpack.c.b16 %v933, %v933
    %v1015 = vpack.c.b16 %v934, %v934
    %v1016 = vpack.c.b16 %v935, %v935
    %v1017 = vpack.c.b16 %v936, %v936
    %v1018 = vpack.c.b16 %v937, %v937
    %v1019 = vpack.c.b16 %v938, %v938
    %v1020 = vpack.c.b16 %v939, %v939
    %v1021 = vpack.c.b16 %v940, %v940
    %v1022 = vpack.c.b16 %v941, %v941
    %v1023 = vpack.c.b16 %v942, %v942
    %v1024 = vpack.c.b16 %v943, %v943
    %v1025 = vpack.c.b16 %v944, %v944
    %v1026 = vpack.c.b16 %v945, %v945
    %v1027 = vpack.c.b16 %v946, %v946
    %v1028 = vpack.c.b16 %v947, %v947
    %v1029 = vpack.c.b16 %v948, %v948
    %v1030 = vpack.c.b16 %v949, %v949
    %v1031 = vpack.c.b16 %v950, %v950
    %v1032 = vpack.c.b16 %v951, %v951
    %v1033 = vpack.c.b16 %v952, %v952
    %v1034 = vpack.c.b16 %v953, %v953
    %v1035 = vpack.c.b16 %v954, %v954
    %v1036 = vpack.c.b16 %v955, %v955
    %v1037 = vpack.c.b16 %v956, %v956
    %1119 = vst [vmem:[#allocation7] sm:$0xf] %v957
    %1120 = vst [vmem:[#allocation7 + $0x4] sm:$0xf] %v958
    %1121 = vst [vmem:[#allocation7 + $0x8] sm:$0xf] %v959
    %1122 = vst [vmem:[#allocation7 + $0xc] sm:$0xf] %v960
    %1123 = vst [vmem:[#allocation7 + $0x10] sm:$0xf] %v961
    %1124 = vst [vmem:[#allocation7 + $0x14] sm:$0xf] %v962
    %1125 = vst [vmem:[#allocation7 + $0x18] sm:$0xf] %v963
    %1126 = vst [vmem:[#allocation7 + $0x1c] sm:$0xf] %v964
    %1127 = vst [vmem:[#allocation7 + $0x20] sm:$0xf] %v965
    %1128 = vst [vmem:[#allocation7 + $0x24] sm:$0xf] %v966
    %1129 = vst [vmem:[#allocation7 + $0x28] sm:$0xf] %v967
    %1130 = vst [vmem:[#allocation7 + $0x2c] sm:$0xf] %v968
    %1131 = vst [vmem:[#allocation7 + $0x30] sm:$0xf] %v969
    %1132 = vst [vmem:[#allocation7 + $0x34] sm:$0xf] %v970
    %1133 = vst [vmem:[#allocation7 + $0x38] sm:$0xf] %v971
    %1134 = vst [vmem:[#allocation7 + $0x3c] sm:$0xf] %v972
    %1135 = vst [vmem:[#allocation7 + $0x40] sm:$0xf] %v973
    %1136 = vst [vmem:[#allocation7 + $0x44] sm:$0xf] %v974
    %1137 = vst [vmem:[#allocation7 + $0x48] sm:$0xf] %v975
    %1138 = vst [vmem:[#allocation7 + $0x4c] sm:$0xf] %v976
    %1139 = vst [vmem:[#allocation7 + $0x50] sm:$0xf] %v977
    %1140 = vst [vmem:[#allocation7 + $0x54] sm:$0xf] %v978
    %1141 = vst [vmem:[#allocation7 + $0x58] sm:$0xf] %v979
    %1142 = vst [vmem:[#allocation7 + $0x5c] sm:$0xf] %v980
    %1143 = vst [vmem:[#allocation7 + $0x60] sm:$0xf] %v981
    %1144 = vst [vmem:[#allocation7 + $0x64] sm:$0xf] %v982
    %1145 = vst [vmem:[#allocation7 + $0x68] sm:$0xf] %v983
    %1146 = vst [vmem:[#allocation7 + $0x6c] sm:$0xf] %v984
    %1147 = vst [vmem:[#allocation7 + $0x70] sm:$0xf] %v985
    %1148 = vst [vmem:[#allocation7 + $0x74] sm:$0xf] %v986
    %1149 = vst [vmem:[#allocation7 + $0x78] sm:$0xf] %v987
    %1150 = vst [vmem:[#allocation7 + $0x7c] sm:$0xf] %v988
    %1151 = vst [vmem:[#allocation7 + $0x80] sm:$0xf] %v989
    %1152 = vst [vmem:[#allocation7 + $0x84] sm:$0xf] %v990
    %1153 = vst [vmem:[#allocation7 + $0x88] sm:$0xf] %v991
    %1154 = vst [vmem:[#allocation7 + $0x8c] sm:$0xf] %v992
    %1155 = vst [vmem:[#allocation7 + $0x90] sm:$0xf] %v993
    %1156 = vst [vmem:[#allocation7 + $0x94] sm:$0xf] %v994
    %1157 = vst [vmem:[#allocation7 + $0x98] sm:$0xf] %v995
    %1158 = vst [vmem:[#allocation7 + $0x9c] sm:$0xf] %v996
    %1159 = vst [vmem:[#allocation7 + $0xa0] sm:$0xf] %v997
    %1160 = vst [vmem:[#allocation7 + $0xa4] sm:$0xf] %v998
    %1161 = vst [vmem:[#allocation7 + $0xa8] sm:$0xf] %v999
    %1162 = vst [vmem:[#allocation7 + $0xac] sm:$0xf] %v1000
    %1163 = vst [vmem:[#allocation7 + $0xb0] sm:$0xf] %v1001
    %1164 = vst [vmem:[#allocation7 + $0xb4] sm:$0xf] %v1002
    %1165 = vst [vmem:[#allocation7 + $0xb8] sm:$0xf] %v1003
    %1166 = vst [vmem:[#allocation7 + $0xbc] sm:$0xf] %v1004
    %1167 = vst [vmem:[#allocation7 + $0xc0] sm:$0xf] %v1005
    %1168 = vst [vmem:[#allocation7 + $0xc4] sm:$0xf] %v1006
    %1169 = vst [vmem:[#allocation7 + $0xc8] sm:$0xf] %v1007
    %1170 = vst [vmem:[#allocation7 + $0xcc] sm:$0xf] %v1008
    %1171 = vst [vmem:[#allocation7 + $0xd0] sm:$0xf] %v1009
    %1172 = vst [vmem:[#allocation7 + $0xd4] sm:$0xf] %v1010
    %1173 = vst [vmem:[#allocation7 + $0xd8] sm:$0xf] %v1011
    %1174 = vst [vmem:[#allocation7 + $0xdc] sm:$0xf] %v1012
    %1175 = vst [vmem:[#allocation7 + $0xe0] sm:$0xf] %v1013
    %1176 = vst [vmem:[#allocation7 + $0xe4] sm:$0xf] %v1014
    %1177 = vst [vmem:[#allocation7 + $0xe8] sm:$0xf] %v1015
    %1178 = vst [vmem:[#allocation7 + $0xec] sm:$0xf] %v1016
    %1179 = vst [vmem:[#allocation7 + $0xf0] sm:$0xf] %v1017
    %1180 = vst [vmem:[#allocation7 + $0xf4] sm:$0xf] %v1018
    %1181 = vst [vmem:[#allocation7 + $0xf8] sm:$0xf] %v1019
    %1182 = vst [vmem:[#allocation7 + $0xfc] sm:$0xf] %v1020
    %1183 = vst [vmem:[#allocation7 + $0x100] sm:$0xf] %v1021
    %1184 = vst [vmem:[#allocation7 + $0x104] sm:$0xf] %v1022
    %1185 = vst [vmem:[#allocation7 + $0x108] sm:$0xf] %v1023
    %1186 = vst [vmem:[#allocation7 + $0x10c] sm:$0xf] %v1024
    %1187 = vst [vmem:[#allocation7 + $0x110] sm:$0xf] %v1025
    %1188 = vst [vmem:[#allocation7 + $0x114] sm:$0xf] %v1026
    %1189 = vst [vmem:[#allocation7 + $0x118] sm:$0xf] %v1027
    %1190 = vst [vmem:[#allocation7 + $0x11c] sm:$0xf] %v1028
    %1191 = vst [vmem:[#allocation7 + $0x120] sm:$0xf] %v1029
    %1192 = vst [vmem:[#allocation7 + $0x124] sm:$0xf] %v1030
    %1193 = vst [vmem:[#allocation7 + $0x128] sm:$0xf] %v1031
    %1194 = vst [vmem:[#allocation7 + $0x12c] sm:$0xf] %v1032
    %1195 = vst [vmem:[#allocation7 + $0x130] sm:$0xf] %v1033
    %1196 = vst [vmem:[#allocation7 + $0x134] sm:$0xf] %v1034
    %1197 = vst [vmem:[#allocation7 + $0x138] sm:$0xf] %v1035
    %1198 = vst [vmem:[#allocation7 + $0x13c] sm:$0xf] %v1036
    %1199 = vst [vmem:[#allocation7 + $0x140] sm:$0xf] %v1037
    %v1200 = vadd.f32 %v469, %v472
    %v1201 = vadd.f32 %v1200, %v477
    %v1202 = vadd.f32 %v1201, %v480
    %v1203 = vadd.f32 %v1202, %v485
    %v1204 = vadd.f32 %v1203, %v488
    %v1205 = vadd.f32 %v1204, %v493
    %v1206 = vadd.f32 %v1205, %v496
    %v1207 = vadd.f32 %v1206, %v501
    %v1208 = vadd.f32 %v1207, %v504
    %v1209 = vadd.f32 %v1208, %v509
    %v1210 = vadd.f32 %v1209, %v512
    %v1211 = vadd.f32 %v1210, %v517
    %v1212 = vadd.f32 %v1211, %v520
    %v1213 = vadd.f32 %v1212, %v525
    %v1214 = vadd.f32 %v1213, %v528
    %v1215 = vadd.f32 %v1214, %v533
    %v1216 = vadd.f32 %v1215, %v536
    %v1217 = vadd.f32 %v1216, %v541
    %v1218 = vadd.f32 %v1217, %v544
    %v1219 = vadd.f32 %v1218, %v549
    %v1220 = vadd.f32 %v1219, %v552
    %v1221 = vadd.f32 %v1220, %v557
    %v1222 = vadd.f32 %v1221, %v560
    %v1223 = vadd.f32 %v1222, %v565
    %v1224 = vadd.f32 %v1223, %v568
    %v1225 = vadd.f32 %v1224, %v573
    %v1226 = vadd.f32 %v1225, %v576
    %v1227 = vadd.f32 %v1226, %v581
    %v1228 = vadd.f32 %v1227, %v584
    %v1229 = vadd.f32 %v1228, %v589
    %v1230 = vadd.f32 %v1229, %v592
    %v1231 = vadd.f32 %v1230, %v597
    %v1232 = vadd.f32 %v1231, %v600
    %v1233 = vadd.f32 %v1232, %v605
    %v1234 = vadd.f32 %v1233, %v608
    %v1235 = vadd.f32 %v1234, %v613
    %v1236 = vadd.f32 %v1235, %v616
    %v1237 = vadd.f32 %v1236, %v621
    %v1238 = vadd.f32 %v1237, %v624
    %v1239 = vadd.f32 %v1238, %v629
    %v1240 = vadd.f32 %v1239, %v632
    %v1241 = vadd.f32 %v1240, %v637
    %v1242 = vadd.f32 %v1241, %v640
    %v1243 = vadd.f32 %v1242, %v645
    %v1244 = vadd.f32 %v1243, %v648
    %v1245 = vadd.f32 %v1244, %v653
    %v1246 = vadd.f32 %v1245, %v656
    %v1247 = vadd.f32 %v1246, %v661
    %v1248 = vadd.f32 %v1247, %v664
    %v1249 = vadd.f32 %v1248, %v669
    %v1250 = vadd.f32 %v1249, %v672
    %v1251 = vadd.f32 %v1250, %v677
    %v1252 = vadd.f32 %v1251, %v680
    %v1253 = vadd.f32 %v1252, %v685
    %v1254 = vadd.f32 %v1253, %v688
    %v1255 = vadd.f32 %v1254, %v693
    %v1256 = vadd.f32 %v1255, %v696
    %v1257 = vadd.f32 %v1256, %v701
    %v1258 = vadd.f32 %v1257, %v704
    %v1259 = vadd.f32 %v1258, %v709
    %v1260 = vadd.f32 %v1259, %v712
    %v1261 = vadd.f32 %v1260, %v717
    %v1262 = vadd.f32 %v1261, %v720
    %v1263 = vadd.f32 %v1262, %v725
    %v1264 = vadd.f32 %v1263, %v728
    %v1265 = vadd.f32 %v1264, %v733
    %v1266 = vadd.f32 %v1265, %v736
    %v1267 = vadd.f32 %v1266, %v741
    %v1268 = vadd.f32 %v1267, %v744
    %v1269 = vadd.f32 %v1268, %v749
    %v1270 = vadd.f32 %v1269, %v752
    %v1271 = vadd.f32 %v1270, %v757
    %v1272 = vadd.f32 %v1271, %v760
    %v1273 = vadd.f32 %v1272, %v765
    %v1274 = vadd.f32 %v1273, %v768
    %v1275 = vadd.f32 %v1274, %v773
    %v1276 = vadd.f32 %v1275, %v776
    %v1277 = vadd.f32 %v1276, %v781
    %v1278 = vadd.f32 %v1277, %v784
    %v1279 = vadd.f32 %v1278, %v789
    %v1280 = vrot.slane %v1279, 4
    %v1281 = vadd.f32 %v1279, %v1280
    %v1282 = vrot.slane %v1281, 2
    %v1283 = vadd.f32 %v1281, %v1282
    %v1284 = vrot.slane %v1283, 1
    %v1285 = vadd.f32 %v1283, %v1284
    %1286 = vst [vmem:[#allocation8] sm:$0x1] %v1285
    %v1287 = vmul.f32 %v469, %v469
    %v1288 = vmul.f32 %v472, %v472
    %v1289 = vmul.f32 %v477, %v477
    %v1290 = vmul.f32 %v480, %v480
    %v1291 = vmul.f32 %v485, %v485
    %v1292 = vmul.f32 %v488, %v488
    %v1293 = vmul.f32 %v493, %v493
    %v1294 = vmul.f32 %v496, %v496
    %v1295 = vmul.f32 %v501, %v501
    %v1296 = vmul.f32 %v504, %v504
    %v1297 = vmul.f32 %v509, %v509
    %v1298 = vmul.f32 %v512, %v512
    %v1299 = vmul.f32 %v517, %v517
    %v1300 = vmul.f32 %v520, %v520
    %v1301 = vmul.f32 %v525, %v525
    %v1302 = vmul.f32 %v528, %v528
    %v1303 = vmul.f32 %v533, %v533
    %v1304 = vmul.f32 %v536, %v536
    %v1305 = vmul.f32 %v541, %v541
    %v1306 = vmul.f32 %v544, %v544
    %v1307 = vmul.f32 %v549, %v549
    %v1308 = vmul.f32 %v552, %v552
    %v1309 = vmul.f32 %v557, %v557
    %v1310 = vmul.f32 %v560, %v560
    %v1311 = vmul.f32 %v565, %v565
    %v1312 = vmul.f32 %v568, %v568
    %v1313 = vmul.f32 %v573, %v573
    %v1314 = vmul.f32 %v576, %v576
    %v1315 = vmul.f32 %v581, %v581
    %v1316 = vmul.f32 %v584, %v584
    %v1317 = vmul.f32 %v589, %v589
    %v1318 = vmul.f32 %v592, %v592
    %v1319 = vmul.f32 %v597, %v597
    %v1320 = vmul.f32 %v600, %v600
    %v1321 = vmul.f32 %v605, %v605
    %v1322 = vmul.f32 %v608, %v608
    %v1323 = vmul.f32 %v613, %v613
    %v1324 = vmul.f32 %v616, %v616
    %v1325 = vmul.f32 %v621, %v621
    %v1326 = vmul.f32 %v624, %v624
    %v1327 = vmul.f32 %v629, %v629
    %v1328 = vmul.f32 %v632, %v632
    %v1329 = vmul.f32 %v637, %v637
    %v1330 = vmul.f32 %v640, %v640
    %v1331 = vmul.f32 %v645, %v645
    %v1332 = vmul.f32 %v648, %v648
    %v1333 = vmul.f32 %v653, %v653
    %v1334 = vmul.f32 %v656, %v656
    %v1335 = vmul.f32 %v661, %v661
    %v1336 = vmul.f32 %v664, %v664
    %v1337 = vmul.f32 %v669, %v669
    %v1338 = vmul.f32 %v672, %v672
    %v1339 = vmul.f32 %v677, %v677
    %v1340 = vmul.f32 %v680, %v680
    %v1341 = vmul.f32 %v685, %v685
    %v1342 = vmul.f32 %v688, %v688
    %v1343 = vmul.f32 %v693, %v693
    %v1344 = vmul.f32 %v696, %v696
    %v1345 = vmul.f32 %v701, %v701
    %v1346 = vmul.f32 %v704, %v704
    %v1347 = vmul.f32 %v709, %v709
    %v1348 = vmul.f32 %v712, %v712
    %v1349 = vmul.f32 %v717, %v717
    %v1350 = vmul.f32 %v720, %v720
    %v1351 = vmul.f32 %v725, %v725
    %v1352 = vmul.f32 %v728, %v728
    %v1353 = vmul.f32 %v733, %v733
    %v1354 = vmul.f32 %v736, %v736
    %v1355 = vmul.f32 %v741, %v741
    %v1356 = vmul.f32 %v744, %v744
    %v1357 = vmul.f32 %v749, %v749
    %v1358 = vmul.f32 %v752, %v752
    %v1359 = vmul.f32 %v757, %v757
    %v1360 = vmul.f32 %v760, %v760
    %v1361 = vmul.f32 %v765, %v765
    %v1362 = vmul.f32 %v768, %v768
    %v1363 = vmul.f32 %v773, %v773
    %v1364 = vmul.f32 %v776, %v776
    %v1365 = vmul.f32 %v781, %v781
    %v1366 = vmul.f32 %v784, %v784
    %v1367 = vmul.f32 %v789, %v789
    %v1368 = vadd.f32 %v1287, %v1288
    %v1369 = vadd.f32 %v1368, %v1289
    %v1370 = vadd.f32 %v1369, %v1290
    %v1371 = vadd.f32 %v1370, %v1291
    %v1372 = vadd.f32 %v1371, %v1292
    %v1373 = vadd.f32 %v1372, %v1293
    %v1374 = vadd.f32 %v1373, %v1294
    %v1375 = vadd.f32 %v1374, %v1295
    %v1376 = vadd.f32 %v1375, %v1296
    %v1377 = vadd.f32 %v1376, %v1297
    %v1378 = vadd.f32 %v1377, %v1298
    %v1379 = vadd.f32 %v1378, %v1299
    %v1380 = vadd.f32 %v1379, %v1300
    %v1381 = vadd.f32 %v1380, %v1301
    %v1382 = vadd.f32 %v1381, %v1302
    %v1383 = vadd.f32 %v1382, %v1303
    %v1384 = vadd.f32 %v1383, %v1304
    %v1385 = vadd.f32 %v1384, %v1305
    %v1386 = vadd.f32 %v1385, %v1306
    %v1387 = vadd.f32 %v1386, %v1307
    %v1388 = vadd.f32 %v1387, %v1308
    %v1389 = vadd.f32 %v1388, %v1309
    %v1390 = vadd.f32 %v1389, %v1310
    %v1391 = vadd.f32 %v1390, %v1311
    %v1392 = vadd.f32 %v1391, %v1312
    %v1393 = vadd.f32 %v1392, %v1313
    %v1394 = vadd.f32 %v1393, %v1314
    %v1395 = vadd.f32 %v1394, %v1315
    %v1396 = vadd.f32 %v1395, %v1316
    %v1397 = vadd.f32 %v1396, %v1317
    %v1398 = vadd.f32 %v1397, %v1318
    %v1399 = vadd.f32 %v1398, %v1319
    %v1400 = vadd.f32 %v1399, %v1320
    %v1401 = vadd.f32 %v1400, %v1321
    %v1402 = vadd.f32 %v1401, %v1322
    %v1403 = vadd.f32 %v1402, %v1323
    %v1404 = vadd.f32 %v1403, %v1324
    %v1405 = vadd.f32 %v1404, %v1325
    %v1406 = vadd.f32 %v1405, %v1326
    %v1407 = vadd.f32 %v1406, %v1327
    %v1408 = vadd.f32 %v1407, %v1328
    %v1409 = vadd.f32 %v1408, %v1329
    %v1410 = vadd.f32 %v1409, %v1330
    %v1411 = vadd.f32 %v1410, %v1331
    %v1412 = vadd.f32 %v1411, %v1332
    %v1413 = vadd.f32 %v1412, %v1333
    %v1414 = vadd.f32 %v1413, %v1334
    %v1415 = vadd.f32 %v1414, %v1335
    %v1416 = vadd.f32 %v1415, %v1336
    %v1417 = vadd.f32 %v1416, %v1337
    %v1418 = vadd.f32 %v1417, %v1338
    %v1419 = vadd.f32 %v1418, %v1339
    %v1420 = vadd.f32 %v1419, %v1340
    %v1421 = vadd.f32 %v1420, %v1341
    %v1422 = vadd.f32 %v1421, %v1342
    %v1423 = vadd.f32 %v1422, %v1343
    %v1424 = vadd.f32 %v1423, %v1344
    %v1425 = vadd.f32 %v1424, %v1345
    %v1426 = vadd.f32 %v1425, %v1346
    %v1427 = vadd.f32 %v1426, %v1347
    %v1428 = vadd.f32 %v1427, %v1348
    %v1429 = vadd.f32 %v1428, %v1349
    %v1430 = vadd.f32 %v1429, %v1350
    %v1431 = vadd.f32 %v1430, %v1351
    %v1432 = vadd.f32 %v1431, %v1352
    %v1433 = vadd.f32 %v1432, %v1353
    %v1434 = vadd.f32 %v1433, %v1354
    %v1435 = vadd.f32 %v1434, %v1355
    %v1436 = vadd.f32 %v1435, %v1356
    %v1437 = vadd.f32 %v1436, %v1357
    %v1438 = vadd.f32 %v1437, %v1358
    %v1439 = vadd.f32 %v1438, %v1359
    %v1440 = vadd.f32 %v1439, %v1360
    %v1441 = vadd.f32 %v1440, %v1361
    %v1442 = vadd.f32 %v1441, %v1362
    %v1443 = vadd.f32 %v1442, %v1363
    %v1444 = vadd.f32 %v1443, %v1364
    %v1445 = vadd.f32 %v1444, %v1365
    %v1446 = vadd.f32 %v1445, %v1366
    %v1447 = vadd.f32 %v1446, %v1367
    %v1448 = vrot.slane %v1447, 4
    %v1449 = vadd.f32 %v1447, %v1448
    %v1450 = vrot.slane %v1449, 2
    %v1451 = vadd.f32 %v1449, %v1450
    %v1452 = vrot.slane %v1451, 1
    %v1453 = vadd.f32 %v1451, %v1452
    %1454 = vst [vmem:[#allocation10] sm:$0x1] %v1453
    // Predicated region
    $region18: #{tpu_custom_call.1} parent=1 // pred_check
      _
    $region19: #{tpu_custom_call.1} parent=1 // pred_check_branch
      %1456 = sbr.rel (0) target = $region21
    $region20: #{tpu_custom_call.1} parent=1 // pred_region
      %s1458 = ssub.s32 5184, 5184
      %1459 = vsyncadd [#allocation4], %s1458
      %s1460 = sshll.u32 [#allocation7], 4
      %s1461 = int_to_ptr.vmem [resolvable:$true] %s1460
      %1466 = dma.vmem_to_hbm [thread:$0]  %s1461, 5184, %s2, [#allocation4], 64, 64, 4
    $region21: #{tpu_custom_call.1} parent=1 // pred_fallthru
      _
    // Predicated region
    $region22: #{tpu_custom_call.1} parent=1 // pred_check
      _
    $region23: #{tpu_custom_call.1} parent=1 // pred_check_branch
      %1468 = sbr.rel (0) target = $region25
    $region24: #{tpu_custom_call.1} parent=1 // pred_region
      %s1470 = ssub.s32 16, 16
      %1471 = vsyncadd [#allocation9], %s1470
      %s1473 = sshll.u32 [#allocation8], 4
      %s1474 = int_to_ptr.vmem [resolvable:$true] %s1473
      %1476 = dma.vmem_to_hbm [thread:$0]  %s1474, 16, %s3, [#allocation9]
    $region25: #{tpu_custom_call.1} parent=1 // pred_fallthru
      _
    // Predicated region
    $region26: #{tpu_custom_call.1} parent=1 // pred_check
      _
    $region27: #{tpu_custom_call.1} parent=1 // pred_check_branch
      %1478 = sbr.rel (0) target = $region29
    $region28: #{tpu_custom_call.1} parent=1 // pred_region
      %s1480 = ssub.s32 16, 16
      %1481 = vsyncadd [#allocation9], %s1480
      %s1483 = sshll.u32 [#allocation10], 4
      %s1484 = int_to_ptr.vmem [resolvable:$true] %s1483
      %1486 = dma.vmem_to_hbm [thread:$0]  %s1484, 16, %s4, [#allocation9]
    $region29: #{tpu_custom_call.1} parent=1 // pred_fallthru
      _
    // Predicated region
    $region30: #{tpu_custom_call.1} parent=1 // pred_check
      _
    $region31: #{tpu_custom_call.1} parent=1 // pred_check_branch
      %1488 = sbr.rel (0) target = $region33
    $region32: #{tpu_custom_call.1} parent=1 // pred_region
      %1489 = dma.done [#allocation4], 5184
    $region33: #{tpu_custom_call.1} parent=1 // pred_fallthru
      _
    // Predicated region
    $region34: #{tpu_custom_call.1} parent=1 // pred_check
      _
    $region35: #{tpu_custom_call.1} parent=1 // pred_check_branch
      %1491 = sbr.rel (0) target = $region37
    $region36: #{tpu_custom_call.1} parent=1 // pred_region
      %1492 = dma.done [#allocation9], 16
    $region37: #{tpu_custom_call.1} parent=1 // pred_fallthru
      _
    // Predicated region
    $region38: #{tpu_custom_call.1} parent=1 // pred_check
      _
    $region39: #{tpu_custom_call.1} parent=1 // pred_check_branch
      %1494 = sbr.rel (0) target = $region41
    $region40: #{tpu_custom_call.1} parent=1 // pred_region
      %1495 = dma.done [#allocation9], 16
    $region41: #{tpu_custom_call.1} parent=1 // pred_fallthru
      _
    %1496 = vsyncpa [#allocation3], 1
    %1497 = vsyncpa [#allocation6], 1
    %1498 = vsyncpa [#allocation4], 1
    %1499 = vsyncpa [#allocation9], 1

</llo_original>
